<compile_context>
chip_gen: v6e
topology: v6e:2x2x1
jax: 0.10.0
libtpu: 0.0.40
codegen_flags: <defaults>
</compile_context>

<pallas_src>
import functools

import jax
import jax.numpy as jnp
from jax import lax
from jax.experimental import pallas as pl
from jax.experimental.pallas import tpu as pltpu


def _round_up(x, m):
    return (x + m - 1) // m * m


# ----------------------------------------------------------------------------
# Pallas kernel: one grid step == `block_timesteps` timesteps for one batch
# tile.  The resident final-state outputs carry h/c across time blocks.
# ----------------------------------------------------------------------------
def _lstm_proj_kernel(lengths_ref,   # (Bt, 1)         int32
                      gin_ref,       # (TT, Bt, 4*Cp)  f32  precomputed x@W_in^T + b
                      w_st_ref,      # (Hp, 4*Cp)      compute dtype
                      w_pr_ref,      # (Cp, Hp)        compute dtype
                      h0_ref,        # (Bt, Hp)        f32
                      c0_ref,        # (Bt, Cp)        f32
                      out_ref,       # (TT, Bt, Hp)    f32
                      hfin_ref,      # (Bt, Hp)        f32, resident h carrier
                      cfin_ref,      # (Bt, Cp)        f32, resident c carrier
                      *,
                      cell_size,
                      block_timesteps,
                      memory_cell_clip_value,
                      state_projection_clip_value):
    t_blk = pl.program_id(1)

    # Load the initial state into the resident final-state blocks at t == 0.
    @pl.when(t_blk == 0)
    def _():
        hfin_ref[...] = h0_ref[...]
        cfin_ref[...] = c0_ref[...]

    lengths = lengths_ref[...]                       # (Bt, 1) int32
    compute_dtype = w_st_ref.dtype
    Cp = cell_size
    t_base = t_blk * block_timesteps

    def step(tt, carry):
        h_prev, c_prev = carry                       # f32 (Bt, Hp) / (Bt, Cp)

        # Recurrent linearity on the MXU (input linearity precomputed).
        gates = gin_ref[tt] + jnp.dot(
            h_prev.astype(compute_dtype), w_st_ref[...],
            preferred_element_type=jnp.float32)      # (Bt, 4*Cp) f32

        input_gate  = jax.nn.sigmoid(gates[:, 0 * Cp:1 * Cp])
        forget_gate = jax.nn.sigmoid(gates[:, 1 * Cp:2 * Cp])
        memory_init = jnp.tanh(gates[:, 2 * Cp:3 * Cp])
        output_gate = jax.nn.sigmoid(gates[:, 3 * Cp:4 * Cp])

        memory = input_gate * memory_init + forget_gate * c_prev
        if memory_cell_clip_value:
            memory = jnp.clip(memory, -memory_cell_clip_value,
                              memory_cell_clip_value)

        pre_proj = output_gate * jnp.tanh(memory)    # (Bt, Cp)
        timestep_output = jnp.dot(
            pre_proj.astype(compute_dtype), w_pr_ref[...],
            preferred_element_type=jnp.float32)      # (Bt, Hp)
        if state_projection_clip_value:
            timestep_output = jnp.clip(timestep_output,
                                       -state_projection_clip_value,
                                       state_projection_clip_value)

        active = (t_base + tt) < lengths             # (Bt, 1) bool
        new_c = jnp.where(active, memory, c_prev)
        new_h = jnp.where(active, timestep_output, h_prev)
        out_ref[tt] = jnp.where(active, timestep_output, 0.0).astype(out_ref.dtype)
        return new_h, new_c

    h_fin, c_fin = lax.fori_loop(0, block_timesteps, step,
                                 (hfin_ref[...], cfin_ref[...]), unroll=True)
    hfin_ref[...] = h_fin
    cfin_ref[...] = c_fin


# ----------------------------------------------------------------------------
# One-time parameter preparation: transpose, lane-pad (C, H -> multiples of
# 128, per-gate), and cast to the MXU compute dtype.  Do NOT redo per call.
# ----------------------------------------------------------------------------
def prepare_params(params, compute_dtype=jnp.bfloat16):
    W_in, W_st, b_st, W_pr = (params["W_in"], params["W_state"],
                              params["b_state"], params["W_proj"])
    four_c, input_size = W_in.shape
    C = four_c // 4
    H = W_pr.shape[0]
    Cp = _round_up(C, 128)
    Hp = _round_up(H, 128)

    def pad_gate_rows(w):                 # (4C, X) -> (4Cp, X), per-gate zero pad
        x_dim = w.shape[1]
        w = w.reshape(4, C, x_dim)
        w = jnp.pad(w, ((0, 0), (0, Cp - C), (0, 0)))
        return w.reshape(4 * Cp, x_dim)

    w_in_p = pad_gate_rows(W_in)                                     # (4Cp, I)
    w_st_p = jnp.pad(pad_gate_rows(W_st), ((0, 0), (0, Hp - H)))     # (4Cp, Hp)
    b_p = jnp.pad(b_st.reshape(4, C), ((0, 0), (0, Cp - C))).reshape(1, 4 * Cp)
    w_pr_p = jnp.pad(W_pr, ((0, Hp - H), (0, Cp - C)))               # (Hp, Cp)

    return {
        "dims": (input_size, H, C, Hp, Cp),
        "compute_dtype": compute_dtype,
        "W_in_T": jnp.asarray(w_in_p.T, compute_dtype),      # (I, 4Cp)
        "b_state": jnp.asarray(b_p, jnp.float32),            # (1, 4Cp)
        "W_state_T": jnp.asarray(w_st_p.T, compute_dtype),   # (Hp, 4Cp)
        "W_proj_T": jnp.asarray(w_pr_p.T, compute_dtype),    # (Cp, Hp)
    }


# ----------------------------------------------------------------------------
# Forward wrapper (PyTorch (batch, time, feature) convention).
# ----------------------------------------------------------------------------
def lstm_cell_with_projection(inputs,            # (B, T, input_size)
                              batch_lengths,     # (B,) int
                              prepared,          # from prepare_params()
                              initial_state=None,
                              memory_cell_clip_value=None,
                              state_projection_clip_value=None,
                              block_timesteps=4):
    input_size, H, C, Hp, Cp = prepared["dims"]
    cdtype = prepared["compute_dtype"]
    B, T, _ = inputs.shape

    Bp = _round_up(max(B, 8), 8)                 # sublane multiple
    Tp = _round_up(T, block_timesteps)
    TT = block_timesteps

    # Time-major, batch/time padded input.
    x = jnp.transpose(inputs, (1, 0, 2)).astype(jnp.float32)        # (T, B, I)
    x = jnp.pad(x, ((0, Tp - T), (0, Bp - B), (0, 0)))

    # Hoisted input linearity: one big (Tp*Bp, I) @ (I, 4Cp) matmul (+ bias).
    gate_in = jnp.dot(x.reshape(Tp * Bp, input_size).astype(cdtype),
                      prepared["W_in_T"],
                      preferred_element_type=jnp.float32)
    gate_in = (gate_in + prepared["b_state"]).reshape(Tp, Bp, 4 * Cp)

    lengths = jnp.pad(jnp.asarray(batch_lengths, jnp.int32),
                      (0, Bp - B)).reshape(Bp, 1)

    if initial_state is None:
        h0 = jnp.zeros((Bp, Hp), jnp.float32)
        c0 = jnp.zeros((Bp, Cp), jnp.float32)
    else:
        h0 = jnp.pad(initial_state[0].reshape(B, H).astype(jnp.float32),
                     ((0, Bp - B), (0, Hp - H)))
        c0 = jnp.pad(initial_state[1].reshape(B, C).astype(jnp.float32),
                     ((0, Bp - B), (0, Cp - C)))

    # Batch tiling: two tiles (one per v7x TensorCore) when the batch is big
    # enough to keep sublanes full per core.
    Bt = Bp // 2 if (Bp >= 16 and Bp % 16 == 0) else Bp
    n_bt = Bp // Bt
    n_tb = Tp // TT

    kernel = functools.partial(
        _lstm_proj_kernel,
        cell_size=Cp,
        block_timesteps=TT,
        memory_cell_clip_value=memory_cell_clip_value,
        state_projection_clip_value=state_projection_clip_value)

    out_seq, h_fin, c_fin = pl.pallas_call(
        kernel,
        out_shape=(
            jax.ShapeDtypeStruct((Tp, Bp, Hp), jnp.float32),
            jax.ShapeDtypeStruct((Bp, Hp), jnp.float32),
            jax.ShapeDtypeStruct((Bp, Cp), jnp.float32),
        ),
        grid_spec=pltpu.PrefetchScalarGridSpec(
            num_scalar_prefetch=0,
            grid=(n_bt, n_tb),
            in_specs=[
                pl.BlockSpec((Bt, 1), lambda b, t: (b, 0)),               # lengths
                pl.BlockSpec((TT, Bt, 4 * Cp), lambda b, t: (t, b, 0)),   # gate_in
                pl.BlockSpec((Hp, 4 * Cp), lambda b, t: (0, 0)),          # W_state^T
                pl.BlockSpec((Cp, Hp), lambda b, t: (0, 0)),              # W_proj^T
                pl.BlockSpec((Bt, Hp), lambda b, t: (b, 0)),              # h0
                pl.BlockSpec((Bt, Cp), lambda b, t: (b, 0)),              # c0
            ],
            out_specs=[
                pl.BlockSpec((TT, Bt, Hp), lambda b, t: (t, b, 0)),       # outputs
                pl.BlockSpec((Bt, Hp), lambda b, t: (b, 0)),              # final h
                pl.BlockSpec((Bt, Cp), lambda b, t: (b, 0)),              # final c
            ],
        ),
        compiler_params=pltpu.CompilerParams(
            dimension_semantics=("parallel", "arbitrary"),
            vmem_limit_bytes=48 * 1024 * 1024),
    )(lengths, gate_in, prepared["W_state_T"], prepared["W_proj_T"], h0, c0)

    output_accumulator = jnp.transpose(out_seq[:T, :B, :H], (1, 0, 2))  # (B, T, H)
    final_state = (h_fin[None, :B, :H], c_fin[None, :B, :C])
    return output_accumulator, final_state


# ----------------------------------------------------------------------------
# Deterministic parameter init mimicking reset_parameters()
# ----------------------------------------------------------------------------
def _orthogonal(key, shape):
    rows, cols = shape
    a = jax.random.normal(key, (rows, cols), jnp.float32)
    if rows < cols:
        a = a.T
    q, r = jnp.linalg.qr(a)
    q = q * jnp.sign(jnp.diag(r))
    if rows < cols:
        q = q.T
    return q[:rows, :cols]


def make_params(key, input_size, hidden_size, cell_size):
    k1, k2, k3 = jax.random.split(key, 3)
    W_in = _orthogonal(k1, (4 * cell_size, input_size))          # Linear weight
    W_state = _orthogonal(k2, (4 * cell_size, hidden_size))
    b_state = jnp.zeros((4 * cell_size,), jnp.float32)
    b_state = b_state.at[cell_size:2 * cell_size].set(1.0)       # forget bias
    bound = 1.0 / jnp.sqrt(float(cell_size))
    W_proj = jax.random.uniform(k3, (hidden_size, cell_size), jnp.float32,
                                -bound, bound)
    return {"W_in": W_in, "W_state": W_state, "b_state": b_state,
            "W_proj": W_proj}


# ----------------------------------------------------------------------------
# Pure-JAX reference (mirrors the PyTorch loop) for verification
# ----------------------------------------------------------------------------
def reference(inputs, lengths, params, mem_clip, state_clip, initial_state=None):
    W_in, W_st, b_st, W_pr = (params["W_in"], params["W_state"],
                              params["b_state"], params["W_proj"])
    B, T, _ = inputs.shape
    C = W_in.shape[0] // 4
    H = W_pr.shape[0]
    if initial_state is None:
        h = jnp.zeros((B, H), jnp.float32)
        c = jnp.zeros((B, C), jnp.float32)
    else:
        h = initial_state[0][0].astype(jnp.float32)
        c = initial_state[1][0].astype(jnp.float32)
    out = jnp.zeros((B, T, H), jnp.float32)
    for t in range(T):
        x_t = inputs[:, t]
        g = x_t @ W_in.T + h @ W_st.T + b_st
        ig = jax.nn.sigmoid(g[:, 0 * C:1 * C])
        fg = jax.nn.sigmoid(g[:, 1 * C:2 * C])
        mi = jnp.tanh(g[:, 2 * C:3 * C])
        og = jax.nn.sigmoid(g[:, 3 * C:4 * C])
        mem = ig * mi + fg * c
        mem = jnp.clip(mem, -mem_clip, mem_clip)
        to = (og * jnp.tanh(mem)) @ W_pr.T
        to = jnp.clip(to, -state_clip, state_clip)
        active = (t < lengths)[:, None]
        c = jnp.where(active, mem, c)
        h = jnp.where(active, to, h)
        out = out.at[:, t].set(jnp.where(active, to, 0.0))
    return out, h, c


if __name__ == "__main__":
    B, T, I, H, C = 2, 8, 16, 32, 64
    MEM_CLIP, STATE_CLIP = 3.0, 3.0

    key = jax.random.PRNGKey(0)
    kp, kx, kh, kc = jax.random.split(key, 4)
    params = make_params(kp, I, H, C)
    inputs = jax.random.normal(kx, (B, T, I), jnp.float32)
    batch_lengths = jnp.array([8, 5], jnp.int32)   # sorted decreasing

    # --- f32 weights: tight check against the pure-JAX reference ------------
    prepared_f32 = prepare_params(params, compute_dtype=jnp.float32)
    out, (h_fin, c_fin) = lstm_cell_with_projection(
        inputs, batch_lengths, prepared_f32,
        memory_cell_clip_value=MEM_CLIP,
        state_projection_clip_value=STATE_CLIP)
    jax.block_until_ready((out, h_fin, c_fin))

    ref_out, ref_h, ref_c = reference(inputs, batch_lengths, params,
                                      MEM_CLIP, STATE_CLIP)
    assert out.shape == (B, T, H)
    assert h_fin.shape == (1, B, H) and c_fin.shape == (1, B, C)
    assert jnp.allclose(out, ref_out, atol=2e-3, rtol=2e-3)
    assert jnp.allclose(h_fin[0], ref_h, atol=2e-3, rtol=2e-3)
    assert jnp.allclose(c_fin[0], ref_c, atol=2e-3, rtol=2e-3)

    # --- f32 weights with an explicit initial state --------------------------
    h0 = 0.1 * jax.random.normal(kh, (1, B, H), jnp.float32)
    c0 = 0.1 * jax.random.normal(kc, (1, B, C), jnp.float32)
    out_i, (h_i, c_i) = lstm_cell_with_projection(
        inputs, batch_lengths, prepared_f32, initial_state=(h0, c0),
        memory_cell_clip_value=MEM_CLIP,
        state_projection_clip_value=STATE_CLIP)
    jax.block_until_ready((out_i, h_i, c_i))
    ref_out_i, ref_h_i, ref_c_i = reference(inputs, batch_lengths, params,
                                            MEM_CLIP, STATE_CLIP,
                                            initial_state=(h0, c0))
    assert jnp.allclose(out_i, ref_out_i, atol=2e-3, rtol=2e-3)
    assert jnp.allclose(h_i[0], ref_h_i, atol=2e-3, rtol=2e-3)
    assert jnp.allclose(c_i[0], ref_c_i, atol=2e-3, rtol=2e-3)

    # --- bf16 weights (MXU-native fast path): looser tolerance ---------------
    prepared_bf16 = prepare_params(params, compute_dtype=jnp.bfloat16)
    out_bf, (h_bf, c_bf) = lstm_cell_with_projection(
        inputs, batch_lengths, prepared_bf16,
        memory_cell_clip_value=MEM_CLIP,
        state_projection_clip_value=STATE_CLIP)
    jax.block_until_ready((out_bf, h_bf, c_bf))
    assert jnp.allclose(out_bf, ref_out, atol=1e-1, rtol=1e-1)
    assert jnp.allclose(h_bf[0], ref_h, atol=1e-1, rtol=1e-1)
    assert jnp.allclose(c_bf[0], ref_c, atol=1e-1, rtol=1e-1)

    print("KERNEL_OK")
</pallas_src>

<mosaic_0001>
module attributes {stable_mosaic.version = 11 : i64} {
  func.func @_lstm_proj_kernel(%arg0: i32, %arg1: i32, %arg2: memref<8x1xi32, #tpu.memory_space<vmem>>, %arg3: memref<4x8x512xf32, #tpu.memory_space<vmem>>, %arg4: memref<128x512xf32, #tpu.memory_space<vmem>>, %arg5: memref<128x128xf32, #tpu.memory_space<vmem>>, %arg6: memref<8x128xf32, #tpu.memory_space<vmem>>, %arg7: memref<8x128xf32, #tpu.memory_space<vmem>>, %arg8: memref<4x8x128xf32, #tpu.memory_space<vmem>>, %arg9: memref<8x128xf32, #tpu.memory_space<vmem>>, %arg10: memref<8x128xf32, #tpu.memory_space<vmem>>) attributes {dimension_semantics = [#tpu.dimension_semantics<parallel>, #tpu.dimension_semantics<arbitrary>], iteration_bounds = array<i64: 1, 2>, scalar_prefetch = 0 : i64, scratch_operands = 0 : i64, tpu.core_type = #tpu.core_type<tc>, window_params = [{transform_indices = @transform_0, window_bounds = array<i64: 8, 1>}, {transform_indices = @transform_1, window_bounds = array<i64: 4, 8, 512>}, {pipeline_mode = #tpu.pipeline_mode<synchronous>, transform_indices = @transform_2, window_bounds = array<i64: 128, 512>}, {pipeline_mode = #tpu.pipeline_mode<synchronous>, transform_indices = @transform_3, window_bounds = array<i64: 128, 128>}, {transform_indices = @transform_4, window_bounds = array<i64: 8, 128>}, {transform_indices = @transform_5, window_bounds = array<i64: 8, 128>}, {transform_indices = @transform_6, window_bounds = array<i64: 4, 8, 128>}, {transform_indices = @transform_7, window_bounds = array<i64: 8, 128>}, {transform_indices = @transform_8, window_bounds = array<i64: 8, 128>}]} {
    %c0_i32 = arith.constant 0 : i32
    %0 = arith.cmpi eq, %arg1, %c0_i32 : i32
    %1 = arith.extui %0 : i1 to i32
    %c0_i32_0 = arith.constant 0 : i32
    %2 = arith.cmpi ne, %1, %c0_i32_0 : i32
    scf.if %2 {
      %c0_83 = arith.constant 0 : index
      %c0_84 = arith.constant 0 : index
      %241 = vector.load %arg6[%c0_83, %c0_84] : memref<8x128xf32, #tpu.memory_space<vmem>>, vector<8x128xf32>
      %c0_85 = arith.constant 0 : index
      %c0_86 = arith.constant 0 : index
      %242 = vector.load %arg9[%c0_85, %c0_86] : memref<8x128xf32, #tpu.memory_space<vmem>>, vector<8x128xf32>
      tpu.vector_store %arg9[%c0_85, %c0_86], %241 {strides = array<i32>} : memref<8x128xf32, #tpu.memory_space<vmem>>, vector<8x128xf32>,
      %c0_87 = arith.constant 0 : index
      %c0_88 = arith.constant 0 : index
      %243 = vector.load %arg7[%c0_87, %c0_88] : memref<8x128xf32, #tpu.memory_space<vmem>>, vector<8x128xf32>
      %c0_89 = arith.constant 0 : index
      %c0_90 = arith.constant 0 : index
      %244 = vector.load %arg10[%c0_89, %c0_90] : memref<8x128xf32, #tpu.memory_space<vmem>>, vector<8x128xf32>
      tpu.vector_store %arg10[%c0_89, %c0_90], %243 {strides = array<i32>} : memref<8x128xf32, #tpu.memory_space<vmem>>, vector<8x128xf32>,
    } else {
    }
    %c0 = arith.constant 0 : index
    %c0_1 = arith.constant 0 : index
    %3 = vector.load %arg2[%c0, %c0_1] : memref<8x1xi32, #tpu.memory_space<vmem>>, vector<8x1xi32>
    %c4_i32 = arith.constant 4 : i32
    %4 = arith.muli %arg1, %c4_i32 : i32
    %c0_2 = arith.constant 0 : index
    %c0_3 = arith.constant 0 : index
    %5 = vector.load %arg9[%c0_2, %c0_3] : memref<8x128xf32, #tpu.memory_space<vmem>>, vector<8x128xf32>
    %c0_4 = arith.constant 0 : index
    %c0_5 = arith.constant 0 : index
    %6 = vector.load %arg10[%c0_4, %c0_5] : memref<8x128xf32, #tpu.memory_space<vmem>>, vector<8x128xf32>
    %c0_i32_6 = arith.constant 0 : i32
    %7 = arith.index_cast %c0_i32_6 : i32 to index
    %c0_7 = arith.constant 0 : index
    %c0_8 = arith.constant 0 : index
    %8 = vector.load %arg3[%7, %c0_7, %c0_8] : memref<4x8x512xf32, #tpu.memory_space<vmem>>, vector<1x8x512xf32>
    %9 = vector.shape_cast %8 : vector<1x8x512xf32> to vector<8x512xf32>
    %c0_9 = arith.constant 0 : index
    %c0_10 = arith.constant 0 : index
    %10 = vector.load %arg4[%c0_9, %c0_10] : memref<128x512xf32, #tpu.memory_space<vmem>>, vector<128x512xf32>
    %cst = arith.constant dense<0.000000e+00> : vector<8x512xf32>
    %11 = tpu.matmul %5, %10, %cst {dimension_numbers = #tpu.dot_dimension_numbers<[1], [0], [0], [1], [0, 0, 1, 1], [], []>} : vector<8x128xf32>, vector<128x512xf32>, vector<8x512xf32> -> vector<8x512xf32>
    %12 = arith.addf %9, %11 : vector<8x512xf32>
    %13 = vector.extract_strided_slice %12 {offsets = [0, 0], sizes = [8, 128], strides = [1, 1]} : vector<8x512xf32> to vector<8x128xf32>
    %14 = arith.negf %13 : vector<8x128xf32>
    %15 = math.exp %14 : vector<8x128xf32>
    %cst_11 = arith.constant 1.000000e+00 : f32
    %16 = vector.broadcast %cst_11 : f32 to vector<8x128xf32>
    %17 = arith.addf %16, %15 : vector<8x128xf32>
    %18 = arith.divf %16, %17 : vector<8x128xf32>
    %19 = vector.extract_strided_slice %12 {offsets = [0, 128], sizes = [8, 128], strides = [1, 1]} : vector<8x512xf32> to vector<8x128xf32>
    %20 = arith.negf %19 : vector<8x128xf32>
    %21 = math.exp %20 : vector<8x128xf32>
    %cst_12 = arith.constant 1.000000e+00 : f32
    %22 = vector.broadcast %cst_12 : f32 to vector<8x128xf32>
    %23 = arith.addf %22, %21 : vector<8x128xf32>
    %24 = arith.divf %22, %23 : vector<8x128xf32>
    %25 = vector.extract_strided_slice %12 {offsets = [0, 256], sizes = [8, 128], strides = [1, 1]} : vector<8x512xf32> to vector<8x128xf32>
    %26 = math.tanh %25 : vector<8x128xf32>
    %27 = vector.extract_strided_slice %12 {offsets = [0, 384], sizes = [8, 128], strides = [1, 1]} : vector<8x512xf32> to vector<8x128xf32>
    %28 = arith.negf %27 : vector<8x128xf32>
    %29 = math.exp %28 : vector<8x128xf32>
    %cst_13 = arith.constant 1.000000e+00 : f32
    %30 = vector.broadcast %cst_13 : f32 to vector<8x128xf32>
    %31 = arith.addf %30, %29 : vector<8x128xf32>
    %32 = arith.divf %30, %31 : vector<8x128xf32>
    %33 = arith.mulf %18, %26 : vector<8x128xf32>
    %34 = arith.mulf %24, %6 : vector<8x128xf32>
    %35 = arith.addf %33, %34 : vector<8x128xf32>
    %cst_14 = arith.constant -3.000000e+00 : f32
    %cst_15 = arith.constant 3.000000e+00 : f32
    %36 = vector.broadcast %cst_14 : f32 to vector<8x128xf32>
    %37 = arith.maximumf %36, %35 : vector<8x128xf32>
    %38 = vector.broadcast %cst_15 : f32 to vector<8x128xf32>
    %39 = arith.minimumf %38, %37 : vector<8x128xf32>
    %40 = math.tanh %39 : vector<8x128xf32>
    %41 = arith.mulf %32, %40 : vector<8x128xf32>
    %c0_16 = arith.constant 0 : index
    %c0_17 = arith.constant 0 : index
    %42 = vector.load %arg5[%c0_16, %c0_17] : memref<128x128xf32, #tpu.memory_space<vmem>>, vector<128x128xf32>
    %cst_18 = arith.constant dense<0.000000e+00> : vector<8x128xf32>
    %43 = tpu.matmul %41, %42, %cst_18 {dimension_numbers = #tpu.dot_dimension_numbers<[1], [0], [0], [1], [0, 0, 1, 1], [], []>} : vector<8x128xf32>, vector<128x128xf32>, vector<8x128xf32> -> vector<8x128xf32>
    %cst_19 = arith.constant -3.000000e+00 : f32
    %cst_20 = arith.constant 3.000000e+00 : f32
    %44 = vector.broadcast %cst_19 : f32 to vector<8x128xf32>
    %45 = arith.maximumf %44, %43 : vector<8x128xf32>
    %46 = vector.broadcast %cst_20 : f32 to vector<8x128xf32>
    %47 = arith.minimumf %46, %45 : vector<8x128xf32>
    %48 = arith.addi %4, %c0_i32_6 : i32
    %49 = vector.broadcast %48 : i32 to vector<8x1xi32>
    %50 = arith.cmpi slt, %49, %3 : vector<8x1xi32>
    %51 = vector.shape_cast %50 : vector<8x1xi1> to vector<8x1xi1>
    %52 = vector.broadcast %51 : vector<8x1xi1> to vector<8x128xi1>
    %53 = arith.select %52, %39, %6 : vector<8x128xi1>, vector<8x128xf32>
    %54 = vector.shape_cast %50 : vector<8x1xi1> to vector<8x1xi1>
    %55 = vector.broadcast %54 : vector<8x1xi1> to vector<8x128xi1>
    %56 = arith.select %55, %47, %5 : vector<8x128xi1>, vector<8x128xf32>
    %cst_21 = arith.constant 0.000000e+00 : f32
    %57 = vector.shape_cast %50 : vector<8x1xi1> to vector<8x1xi1>
    %58 = vector.broadcast %57 : vector<8x1xi1> to vector<8x128xi1>
    %59 = vector.broadcast %cst_21 : f32 to vector<8x128xf32>
    %60 = arith.select %58, %47, %59 : vector<8x128xi1>, vector<8x128xf32>
    %61 = arith.index_cast %c0_i32_6 : i32 to index
    %c0_22 = arith.constant 0 : index
    %c0_23 = arith.constant 0 : index
    %62 = vector.load %arg8[%61, %c0_22, %c0_23] : memref<4x8x128xf32, #tpu.memory_space<vmem>>, vector<1x8x128xf32>
    %63 = vector.shape_cast %62 : vector<1x8x128xf32> to vector<8x128xf32>
    %64 = vector.shape_cast %60 : vector<8x128xf32> to vector<1x8x128xf32>
    tpu.vector_store %arg8[%61, %c0_22, %c0_23], %64 {strides = array<i32>} : memref<4x8x128xf32, #tpu.memory_space<vmem>>, vector<1x8x128xf32>,
    %c1_i32 = arith.constant 1 : i32
    %65 = arith.index_cast %c1_i32 : i32 to index
    %c0_24 = arith.constant 0 : index
    %c0_25 = arith.constant 0 : index
    %66 = vector.load %arg3[%65, %c0_24, %c0_25] : memref<4x8x512xf32, #tpu.memory_space<vmem>>, vector<1x8x512xf32>
    %67 = vector.shape_cast %66 : vector<1x8x512xf32> to vector<8x512xf32>
    %c0_26 = arith.constant 0 : index
    %c0_27 = arith.constant 0 : index
    %68 = vector.load %arg4[%c0_26, %c0_27] : memref<128x512xf32, #tpu.memory_space<vmem>>, vector<128x512xf32>
    %cst_28 = arith.constant dense<0.000000e+00> : vector<8x512xf32>
    %69 = tpu.matmul %56, %68, %cst_28 {dimension_numbers = #tpu.dot_dimension_numbers<[1], [0], [0], [1], [0, 0, 1, 1], [], []>} : vector<8x128xf32>, vector<128x512xf32>, vector<8x512xf32> -> vector<8x512xf32>
    %70 = arith.addf %67, %69 : vector<8x512xf32>
    %71 = vector.extract_strided_slice %70 {offsets = [0, 0], sizes = [8, 128], strides = [1, 1]} : vector<8x512xf32> to vector<8x128xf32>
    %72 = arith.negf %71 : vector<8x128xf32>
    %73 = math.exp %72 : vector<8x128xf32>
    %cst_29 = arith.constant 1.000000e+00 : f32
    %74 = vector.broadcast %cst_29 : f32 to vector<8x128xf32>
    %75 = arith.addf %74, %73 : vector<8x128xf32>
    %76 = arith.divf %74, %75 : vector<8x128xf32>
    %77 = vector.extract_strided_slice %70 {offsets = [0, 128], sizes = [8, 128], strides = [1, 1]} : vector<8x512xf32> to vector<8x128xf32>
    %78 = arith.negf %77 : vector<8x128xf32>
    %79 = math.exp %78 : vector<8x128xf32>
    %cst_30 = arith.constant 1.000000e+00 : f32
    %80 = vector.broadcast %cst_30 : f32 to vector<8x128xf32>
    %81 = arith.addf %80, %79 : vector<8x128xf32>
    %82 = arith.divf %80, %81 : vector<8x128xf32>
    %83 = vector.extract_strided_slice %70 {offsets = [0, 256], sizes = [8, 128], strides = [1, 1]} : vector<8x512xf32> to vector<8x128xf32>
    %84 = math.tanh %83 : vector<8x128xf32>
    %85 = vector.extract_strided_slice %70 {offsets = [0, 384], sizes = [8, 128], strides = [1, 1]} : vector<8x512xf32> to vector<8x128xf32>
    %86 = arith.negf %85 : vector<8x128xf32>
    %87 = math.exp %86 : vector<8x128xf32>
    %cst_31 = arith.constant 1.000000e+00 : f32
    %88 = vector.broadcast %cst_31 : f32 to vector<8x128xf32>
    %89 = arith.addf %88, %87 : vector<8x128xf32>
    %90 = arith.divf %88, %89 : vector<8x128xf32>
    %91 = arith.mulf %76, %84 : vector<8x128xf32>
    %92 = arith.mulf %82, %53 : vector<8x128xf32>
    %93 = arith.addf %91, %92 : vector<8x128xf32>
    %cst_32 = arith.constant -3.000000e+00 : f32
    %cst_33 = arith.constant 3.000000e+00 : f32
    %94 = vector.broadcast %cst_32 : f32 to vector<8x128xf32>
    %95 = arith.maximumf %94, %93 : vector<8x128xf32>
    %96 = vector.broadcast %cst_33 : f32 to vector<8x128xf32>
    %97 = arith.minimumf %96, %95 : vector<8x128xf32>
    %98 = math.tanh %97 : vector<8x128xf32>
    %99 = arith.mulf %90, %98 : vector<8x128xf32>
    %c0_34 = arith.constant 0 : index
    %c0_35 = arith.constant 0 : index
    %100 = vector.load %arg5[%c0_34, %c0_35] : memref<128x128xf32, #tpu.memory_space<vmem>>, vector<128x128xf32>
    %cst_36 = arith.constant dense<0.000000e+00> : vector<8x128xf32>
    %101 = tpu.matmul %99, %100, %cst_36 {dimension_numbers = #tpu.dot_dimension_numbers<[1], [0], [0], [1], [0, 0, 1, 1], [], []>} : vector<8x128xf32>, vector<128x128xf32>, vector<8x128xf32> -> vector<8x128xf32>
    %cst_37 = arith.constant -3.000000e+00 : f32
    %cst_38 = arith.constant 3.000000e+00 : f32
    %102 = vector.broadcast %cst_37 : f32 to vector<8x128xf32>
    %103 = arith.maximumf %102, %101 : vector<8x128xf32>
    %104 = vector.broadcast %cst_38 : f32 to vector<8x128xf32>
    %105 = arith.minimumf %104, %103 : vector<8x128xf32>
    %106 = arith.addi %4, %c1_i32 : i32
    %107 = vector.broadcast %106 : i32 to vector<8x1xi32>
    %108 = arith.cmpi slt, %107, %3 : vector<8x1xi32>
    %109 = vector.shape_cast %108 : vector<8x1xi1> to vector<8x1xi1>
    %110 = vector.broadcast %109 : vector<8x1xi1> to vector<8x128xi1>
    %111 = arith.select %110, %97, %53 : vector<8x128xi1>, vector<8x128xf32>
    %112 = vector.shape_cast %108 : vector<8x1xi1> to vector<8x1xi1>
    %113 = vector.broadcast %112 : vector<8x1xi1> to vector<8x128xi1>
    %114 = arith.select %113, %105, %56 : vector<8x128xi1>, vector<8x128xf32>
    %cst_39 = arith.constant 0.000000e+00 : f32
    %115 = vector.shape_cast %108 : vector<8x1xi1> to vector<8x1xi1>
    %116 = vector.broadcast %115 : vector<8x1xi1> to vector<8x128xi1>
    %117 = vector.broadcast %cst_39 : f32 to vector<8x128xf32>
    %118 = arith.select %116, %105, %117 : vector<8x128xi1>, vector<8x128xf32>
    %119 = arith.index_cast %c1_i32 : i32 to index
    %c0_40 = arith.constant 0 : index
    %c0_41 = arith.constant 0 : index
    %120 = vector.load %arg8[%119, %c0_40, %c0_41] : memref<4x8x128xf32, #tpu.memory_space<vmem>>, vector<1x8x128xf32>
    %121 = vector.shape_cast %120 : vector<1x8x128xf32> to vector<8x128xf32>
    %122 = vector.shape_cast %118 : vector<8x128xf32> to vector<1x8x128xf32>
    tpu.vector_store %arg8[%119, %c0_40, %c0_41], %122 {strides = array<i32>} : memref<4x8x128xf32, #tpu.memory_space<vmem>>, vector<1x8x128xf32>,
    %c2_i32 = arith.constant 2 : i32
    %123 = arith.index_cast %c2_i32 : i32 to index
    %c0_42 = arith.constant 0 : index
    %c0_43 = arith.constant 0 : index
    %124 = vector.load %arg3[%123, %c0_42, %c0_43] : memref<4x8x512xf32, #tpu.memory_space<vmem>>, vector<1x8x512xf32>
    %125 = vector.shape_cast %124 : vector<1x8x512xf32> to vector<8x512xf32>
    %c0_44 = arith.constant 0 : index
    %c0_45 = arith.constant 0 : index
    %126 = vector.load %arg4[%c0_44, %c0_45] : memref<128x512xf32, #tpu.memory_space<vmem>>, vector<128x512xf32>
    %cst_46 = arith.constant dense<0.000000e+00> : vector<8x512xf32>
    %127 = tpu.matmul %114, %126, %cst_46 {dimension_numbers = #tpu.dot_dimension_numbers<[1], [0], [0], [1], [0, 0, 1, 1], [], []>} : vector<8x128xf32>, vector<128x512xf32>, vector<8x512xf32> -> vector<8x512xf32>
    %128 = arith.addf %125, %127 : vector<8x512xf32>
    %129 = vector.extract_strided_slice %128 {offsets = [0, 0], sizes = [8, 128], strides = [1, 1]} : vector<8x512xf32> to vector<8x128xf32>
    %130 = arith.negf %129 : vector<8x128xf32>
    %131 = math.exp %130 : vector<8x128xf32>
    %cst_47 = arith.constant 1.000000e+00 : f32
    %132 = vector.broadcast %cst_47 : f32 to vector<8x128xf32>
    %133 = arith.addf %132, %131 : vector<8x128xf32>
    %134 = arith.divf %132, %133 : vector<8x128xf32>
    %135 = vector.extract_strided_slice %128 {offsets = [0, 128], sizes = [8, 128], strides = [1, 1]} : vector<8x512xf32> to vector<8x128xf32>
    %136 = arith.negf %135 : vector<8x128xf32>
    %137 = math.exp %136 : vector<8x128xf32>
    %cst_48 = arith.constant 1.000000e+00 : f32
    %138 = vector.broadcast %cst_48 : f32 to vector<8x128xf32>
    %139 = arith.addf %138, %137 : vector<8x128xf32>
    %140 = arith.divf %138, %139 : vector<8x128xf32>
    %141 = vector.extract_strided_slice %128 {offsets = [0, 256], sizes = [8, 128], strides = [1, 1]} : vector<8x512xf32> to vector<8x128xf32>
    %142 = math.tanh %141 : vector<8x128xf32>
    %143 = vector.extract_strided_slice %128 {offsets = [0, 384], sizes = [8, 128], strides = [1, 1]} : vector<8x512xf32> to vector<8x128xf32>
    %144 = arith.negf %143 : vector<8x128xf32>
    %145 = math.exp %144 : vector<8x128xf32>
    %cst_49 = arith.constant 1.000000e+00 : f32
    %146 = vector.broadcast %cst_49 : f32 to vector<8x128xf32>
    %147 = arith.addf %146, %145 : vector<8x128xf32>
    %148 = arith.divf %146, %147 : vector<8x128xf32>
    %149 = arith.mulf %134, %142 : vector<8x128xf32>
    %150 = arith.mulf %140, %111 : vector<8x128xf32>
    %151 = arith.addf %149, %150 : vector<8x128xf32>
    %cst_50 = arith.constant -3.000000e+00 : f32
    %cst_51 = arith.constant 3.000000e+00 : f32
    %152 = vector.broadcast %cst_50 : f32 to vector<8x128xf32>
    %153 = arith.maximumf %152, %151 : vector<8x128xf32>
    %154 = vector.broadcast %cst_51 : f32 to vector<8x128xf32>
    %155 = arith.minimumf %154, %153 : vector<8x128xf32>
    %156 = math.tanh %155 : vector<8x128xf32>
    %157 = arith.mulf %148, %156 : vector<8x128xf32>
    %c0_52 = arith.constant 0 : index
    %c0_53 = arith.constant 0 : index
    %158 = vector.load %arg5[%c0_52, %c0_53] : memref<128x128xf32, #tpu.memory_space<vmem>>, vector<128x128xf32>
    %cst_54 = arith.constant dense<0.000000e+00> : vector<8x128xf32>
    %159 = tpu.matmul %157, %158, %cst_54 {dimension_numbers = #tpu.dot_dimension_numbers<[1], [0], [0], [1], [0, 0, 1, 1], [], []>} : vector<8x128xf32>, vector<128x128xf32>, vector<8x128xf32> -> vector<8x128xf32>
    %cst_55 = arith.constant -3.000000e+00 : f32
    %cst_56 = arith.constant 3.000000e+00 : f32
    %160 = vector.broadcast %cst_55 : f32 to vector<8x128xf32>
    %161 = arith.maximumf %160, %159 : vector<8x128xf32>
    %162 = vector.broadcast %cst_56 : f32 to vector<8x128xf32>
    %163 = arith.minimumf %162, %161 : vector<8x128xf32>
    %164 = arith.addi %4, %c2_i32 : i32
    %165 = vector.broadcast %164 : i32 to vector<8x1xi32>
    %166 = arith.cmpi slt, %165, %3 : vector<8x1xi32>
    %167 = vector.shape_cast %166 : vector<8x1xi1> to vector<8x1xi1>
    %168 = vector.broadcast %167 : vector<8x1xi1> to vector<8x128xi1>
    %169 = arith.select %168, %155, %111 : vector<8x128xi1>, vector<8x128xf32>
    %170 = vector.shape_cast %166 : vector<8x1xi1> to vector<8x1xi1>
    %171 = vector.broadcast %170 : vector<8x1xi1> to vector<8x128xi1>
    %172 = arith.select %171, %163, %114 : vector<8x128xi1>, vector<8x128xf32>
    %cst_57 = arith.constant 0.000000e+00 : f32
    %173 = vector.shape_cast %166 : vector<8x1xi1> to vector<8x1xi1>
    %174 = vector.broadcast %173 : vector<8x1xi1> to vector<8x128xi1>
    %175 = vector.broadcast %cst_57 : f32 to vector<8x128xf32>
    %176 = arith.select %174, %163, %175 : vector<8x128xi1>, vector<8x128xf32>
    %177 = arith.index_cast %c2_i32 : i32 to index
    %c0_58 = arith.constant 0 : index
    %c0_59 = arith.constant 0 : index
    %178 = vector.load %arg8[%177, %c0_58, %c0_59] : memref<4x8x128xf32, #tpu.memory_space<vmem>>, vector<1x8x128xf32>
    %179 = vector.shape_cast %178 : vector<1x8x128xf32> to vector<8x128xf32>
    %180 = vector.shape_cast %176 : vector<8x128xf32> to vector<1x8x128xf32>
    tpu.vector_store %arg8[%177, %c0_58, %c0_59], %180 {strides = array<i32>} : memref<4x8x128xf32, #tpu.memory_space<vmem>>, vector<1x8x128xf32>,
    %c3_i32 = arith.constant 3 : i32
    %181 = arith.index_cast %c3_i32 : i32 to index
    %c0_60 = arith.constant 0 : index
    %c0_61 = arith.constant 0 : index
    %182 = vector.load %arg3[%181, %c0_60, %c0_61] : memref<4x8x512xf32, #tpu.memory_space<vmem>>, vector<1x8x512xf32>
    %183 = vector.shape_cast %182 : vector<1x8x512xf32> to vector<8x512xf32>
    %c0_62 = arith.constant 0 : index
    %c0_63 = arith.constant 0 : index
    %184 = vector.load %arg4[%c0_62, %c0_63] : memref<128x512xf32, #tpu.memory_space<vmem>>, vector<128x512xf32>
    %cst_64 = arith.constant dense<0.000000e+00> : vector<8x512xf32>
    %185 = tpu.matmul %172, %184, %cst_64 {dimension_numbers = #tpu.dot_dimension_numbers<[1], [0], [0], [1], [0, 0, 1, 1], [], []>} : vector<8x128xf32>, vector<128x512xf32>, vector<8x512xf32> -> vector<8x512xf32>
    %186 = arith.addf %183, %185 : vector<8x512xf32>
    %187 = vector.extract_strided_slice %186 {offsets = [0, 0], sizes = [8, 128], strides = [1, 1]} : vector<8x512xf32> to vector<8x128xf32>
    %188 = arith.negf %187 : vector<8x128xf32>
    %189 = math.exp %188 : vector<8x128xf32>
    %cst_65 = arith.constant 1.000000e+00 : f32
    %190 = vector.broadcast %cst_65 : f32 to vector<8x128xf32>
    %191 = arith.addf %190, %189 : vector<8x128xf32>
    %192 = arith.divf %190, %191 : vector<8x128xf32>
    %193 = vector.extract_strided_slice %186 {offsets = [0, 128], sizes = [8, 128], strides = [1, 1]} : vector<8x512xf32> to vector<8x128xf32>
    %194 = arith.negf %193 : vector<8x128xf32>
    %195 = math.exp %194 : vector<8x128xf32>
    %cst_66 = arith.constant 1.000000e+00 : f32
    %196 = vector.broadcast %cst_66 : f32 to vector<8x128xf32>
    %197 = arith.addf %196, %195 : vector<8x128xf32>
    %198 = arith.divf %196, %197 : vector<8x128xf32>
    %199 = vector.extract_strided_slice %186 {offsets = [0, 256], sizes = [8, 128], strides = [1, 1]} : vector<8x512xf32> to vector<8x128xf32>
    %200 = math.tanh %199 : vector<8x128xf32>
    %201 = vector.extract_strided_slice %186 {offsets = [0, 384], sizes = [8, 128], strides = [1, 1]} : vector<8x512xf32> to vector<8x128xf32>
    %202 = arith.negf %201 : vector<8x128xf32>
    %203 = math.exp %202 : vector<8x128xf32>
    %cst_67 = arith.constant 1.000000e+00 : f32
    %204 = vector.broadcast %cst_67 : f32 to vector<8x128xf32>
    %205 = arith.addf %204, %203 : vector<8x128xf32>
    %206 = arith.divf %204, %205 : vector<8x128xf32>
    %207 = arith.mulf %192, %200 : vector<8x128xf32>
    %208 = arith.mulf %198, %169 : vector<8x128xf32>
    %209 = arith.addf %207, %208 : vector<8x128xf32>
    %cst_68 = arith.constant -3.000000e+00 : f32
    %cst_69 = arith.constant 3.000000e+00 : f32
    %210 = vector.broadcast %cst_68 : f32 to vector<8x128xf32>
    %211 = arith.maximumf %210, %209 : vector<8x128xf32>
    %212 = vector.broadcast %cst_69 : f32 to vector<8x128xf32>
    %213 = arith.minimumf %212, %211 : vector<8x128xf32>
    %214 = math.tanh %213 : vector<8x128xf32>
    %215 = arith.mulf %206, %214 : vector<8x128xf32>
    %c0_70 = arith.constant 0 : index
    %c0_71 = arith.constant 0 : index
    %216 = vector.load %arg5[%c0_70, %c0_71] : memref<128x128xf32, #tpu.memory_space<vmem>>, vector<128x128xf32>
    %cst_72 = arith.constant dense<0.000000e+00> : vector<8x128xf32>
    %217 = tpu.matmul %215, %216, %cst_72 {dimension_numbers = #tpu.dot_dimension_numbers<[1], [0], [0], [1], [0, 0, 1, 1], [], []>} : vector<8x128xf32>, vector<128x128xf32>, vector<8x128xf32> -> vector<8x128xf32>
    %cst_73 = arith.constant -3.000000e+00 : f32
    %cst_74 = arith.constant 3.000000e+00 : f32
    %218 = vector.broadcast %cst_73 : f32 to vector<8x128xf32>
    %219 = arith.maximumf %218, %217 : vector<8x128xf32>
    %220 = vector.broadcast %cst_74 : f32 to vector<8x128xf32>
    %221 = arith.minimumf %220, %219 : vector<8x128xf32>
    %222 = arith.addi %4, %c3_i32 : i32
    %223 = vector.broadcast %222 : i32 to vector<8x1xi32>
    %224 = arith.cmpi slt, %223, %3 : vector<8x1xi32>
    %225 = vector.shape_cast %224 : vector<8x1xi1> to vector<8x1xi1>
    %226 = vector.broadcast %225 : vector<8x1xi1> to vector<8x128xi1>
    %227 = arith.select %226, %213, %169 : vector<8x128xi1>, vector<8x128xf32>
    %228 = vector.shape_cast %224 : vector<8x1xi1> to vector<8x1xi1>
    %229 = vector.broadcast %228 : vector<8x1xi1> to vector<8x128xi1>
    %230 = arith.select %229, %221, %172 : vector<8x128xi1>, vector<8x128xf32>
    %cst_75 = arith.constant 0.000000e+00 : f32
    %231 = vector.shape_cast %224 : vector<8x1xi1> to vector<8x1xi1>
    %232 = vector.broadcast %231 : vector<8x1xi1> to vector<8x128xi1>
    %233 = vector.broadcast %cst_75 : f32 to vector<8x128xf32>
    %234 = arith.select %232, %221, %233 : vector<8x128xi1>, vector<8x128xf32>
    %235 = arith.index_cast %c3_i32 : i32 to index
    %c0_76 = arith.constant 0 : index
    %c0_77 = arith.constant 0 : index
    %236 = vector.load %arg8[%235, %c0_76, %c0_77] : memref<4x8x128xf32, #tpu.memory_space<vmem>>, vector<1x8x128xf32>
    %237 = vector.shape_cast %236 : vector<1x8x128xf32> to vector<8x128xf32>
    %238 = vector.shape_cast %234 : vector<8x128xf32> to vector<1x8x128xf32>
    tpu.vector_store %arg8[%235, %c0_76, %c0_77], %238 {strides = array<i32>} : memref<4x8x128xf32, #tpu.memory_space<vmem>>, vector<1x8x128xf32>,
    %c4_i32_78 = arith.constant 4 : i32
    %c0_79 = arith.constant 0 : index
    %c0_80 = arith.constant 0 : index
    %239 = vector.load %arg9[%c0_79, %c0_80] : memref<8x128xf32, #tpu.memory_space<vmem>>, vector<8x128xf32>
    tpu.vector_store %arg9[%c0_79, %c0_80], %230 {strides = array<i32>} : memref<8x128xf32, #tpu.memory_space<vmem>>, vector<8x128xf32>,
    %c0_81 = arith.constant 0 : index
    %c0_82 = arith.constant 0 : index
    %240 = vector.load %arg10[%c0_81, %c0_82] : memref<8x128xf32, #tpu.memory_space<vmem>>, vector<8x128xf32>
    tpu.vector_store %arg10[%c0_81, %c0_82], %227 {strides = array<i32>} : memref<8x128xf32, #tpu.memory_space<vmem>>, vector<8x128xf32>,
    return
  }
  func.func @transform_0(%arg0: i32, %arg1: i32) -> (i32, i32) {
    %c0_i32 = arith.constant 0 : i32
    %c0_i32_0 = arith.constant 0 : i32
    return %arg0, %c0_i32 : i32, i32
  }
  func.func @transform_1(%arg0: i32, %arg1: i32) -> (i32, i32, i32) {
    %c0_i32 = arith.constant 0 : i32
    %c0_i32_0 = arith.constant 0 : i32
    return %arg1, %arg0, %c0_i32 : i32, i32, i32
  }
  func.func @transform_2(%arg0: i32, %arg1: i32) -> (i32, i32) {
    %c0_i32 = arith.constant 0 : i32
    %c0_i32_0 = arith.constant 0 : i32
    %c0_i32_1 = arith.constant 0 : i32
    return %c0_i32, %c0_i32_0 : i32, i32
  }
  func.func @transform_3(%arg0: i32, %arg1: i32) -> (i32, i32) {
    %c0_i32 = arith.constant 0 : i32
    %c0_i32_0 = arith.constant 0 : i32
    %c0_i32_1 = arith.constant 0 : i32
    return %c0_i32, %c0_i32_0 : i32, i32
  }
  func.func @transform_4(%arg0: i32, %arg1: i32) -> (i32, i32) {
    %c0_i32 = arith.constant 0 : i32
    %c0_i32_0 = arith.constant 0 : i32
    return %arg0, %c0_i32 : i32, i32
  }
  func.func @transform_5(%arg0: i32, %arg1: i32) -> (i32, i32) {
    %c0_i32 = arith.constant 0 : i32
    %c0_i32_0 = arith.constant 0 : i32
    return %arg0, %c0_i32 : i32, i32
  }
  func.func @transform_6(%arg0: i32, %arg1: i32) -> (i32, i32, i32) {
    %c0_i32 = arith.constant 0 : i32
    %c0_i32_0 = arith.constant 0 : i32
    return %arg1, %arg0, %c0_i32 : i32, i32, i32
  }
  func.func @transform_7(%arg0: i32, %arg1: i32) -> (i32, i32) {
    %c0_i32 = arith.constant 0 : i32
    %c0_i32_0 = arith.constant 0 : i32
    return %arg0, %c0_i32 : i32, i32
  }
  func.func @transform_8(%arg0: i32, %arg1: i32) -> (i32, i32) {
    %c0_i32 = arith.constant 0 : i32
    %c0_i32_0 = arith.constant 0 : i32
    return %arg0, %c0_i32 : i32, i32
  }
}

</mosaic_0001>

<llo_original>
// kernel: tpu_custom_call.1
$region0: #{tpu_custom_call.1}
  #allocation0 [shape = 'u32[]', space=smem, size = 0x4, offset = 0x4, fixed_abs, tag = 'smem constant byte address 0x4 - core index']
  #allocation1 [shape = 'u32[144,128]{1,0:T(1,128)}', space=vmem, size = 0x12000, scoped, tag = 'internal scratch']
  %s0 = inlined_call_operand.vmem [shape: s32[8,1], index: 0, kind: input, shape index: {}]
  %s1 = inlined_call_operand.hbm [shape: f32[8,8,512], index: 1, kind: input, shape index: {}]
  %s2 = inlined_call_operand.hbm [shape: f32[128,512], index: 2, kind: input, shape index: {}]
  %s3 = inlined_call_operand.hbm [shape: f32[128,128], index: 3, kind: input, shape index: {}]
  %s4 = inlined_call_operand.vmem [shape: f32[8,128], index: 4, kind: input, shape index: {}]
  %s5 = inlined_call_operand.vmem [shape: f32[8,128], index: 5, kind: input, shape index: {}]
  %s6 = inlined_call_operand.hbm [shape: f32[8,8,128], index: 6, kind: output, shape index: {0}]
  %s7 = inlined_call_operand.hbm [shape: f32[8,128], index: 7, kind: output, shape index: {1}]
  %s8 = inlined_call_operand.hbm [shape: f32[8,128], index: 8, kind: output, shape index: {2}]
  %9 = xla_tuple %s6, %s7, %s8
  %s10 = sld [smem:[#allocation0]]
  $region89: #{tpu_custom_call.1} parent=0
    _
  %s12 = ssub.s32 1, %s10
  %s13 = scalar_select 0, %s12, %s10
  $region1: #{tpu_custom_call.1} parent=0
    #allocation2 [shape = 'u8[131072]{0}', space=vmem, size = 0x20000, scoped, tag = 'input window, operand 1']
    #allocation3 [shape = 's32[2]{0}', space=sflag, size = 0x8, scoped, tag = 'scoped memory for tpu_custom_call.1']
    #allocation4 [shape = 's32[2]{0}', space=sflag, size = 0x8, scoped, tag = 'scoped memory for tpu_custom_call.1']
    #allocation5 [shape = 'u8[262144]{0}', space=vmem, size = 0x40000, scoped, tag = 'input window, operand 2, single buffered']
    #allocation6 [shape = 's32[1]{0}', space=sflag, size = 0x4, scoped, tag = 'scoped memory for tpu_custom_call.1']
    #allocation7 [shape = 'u8[65536]{0}', space=vmem, size = 0x10000, scoped, tag = 'input window, operand 3, single buffered']
    #allocation8 [shape = 'u8[32768]{0}', space=vmem, size = 0x8000, scoped, tag = 'output window, operand 0']
    #allocation9 [shape = 'u8[4096]{0}', space=vmem, size = 0x1000, scoped, tag = 'output window, operand 1, single buffered']
    #allocation10 [shape = 's32[1]{0}', space=sflag, size = 0x4, scoped, tag = 'scoped memory for tpu_custom_call.1']
    #allocation11 [shape = 'u8[4096]{0}', space=vmem, size = 0x1000, scoped, tag = 'output window, operand 2, single buffered']
    %14 = vsyncpa [#allocation3], 0
    %s15 = scalar_lea.sflag [#allocation3], 1
    %16 = vsyncpa %s15, 0
    %17 = vsyncpa [#allocation6], 0
    %18 = vsyncpa [#allocation4], 0
    %s19 = scalar_lea.sflag [#allocation4], 1
    %20 = vsyncpa %s19, 0
    %21 = vsyncpa [#allocation10], 0
    loop: start=0, step=1, limit=4
    $region2: #{tpu_custom_call.1} parent=1 // loop_pre_header
      _
    $region3: #{tpu_custom_call.1} parent=1 // loop_header
      %s23 = sphi 0, %s27
      %p24 = scmp.ge.s32.totalorder %s23, 4
      %s30 = sphi 0, %s42
      %s31 = sphi 0, %s38
      %s32 = sphi 0, %s30
      %s33 = sphi 0, %s31
      %s34 = sphi 0, %s32
      %s35 = sphi 0, %s33
      %s45 = sphi 0, %s47
      %s48 = sphi 0, %s45
      %s49 = sphi 0, %s48
      %s65 = sphi 0, %s49
      %s73 = sphi 0, %s75
      %s76 = sphi 0, %s73
      %s77 = sphi 0, %s76
      %s93 = sphi 0, %s77
      %s97 = sphi 0, %s97
      %s99 = sphi 0, %s97
      %s100 = sphi 0, %s99
      %s114 = sphi 0, %s100
      %s118 = sphi 0, %s118
      %s120 = sphi 0, %s118
      %s121 = sphi 0, %s120
      %s135 = sphi 0, %s121
      %s141 = sphi 0, %s143
      %s144 = sphi 0, %s141
      %s145 = sphi 0, %s144
      %s161 = sphi 0, %s145
      %s167 = sphi 0, %s169
      %s170 = sphi 0, %s167
      %s171 = sphi 0, %s170
      %s187 = sphi 0, %s171
      %s195 = sphi 0, %s197
      %s198 = sphi 0, %s195
      %s199 = sphi 0, %s198
      %s215 = sphi 0, %s199
      %s221 = sphi 0, %s223
      %s224 = sphi 0, %s221
      %s225 = sphi 0, %s224
      %s241 = sphi 0, %s225
      %s247 = sphi 0, %s249
      %s250 = sphi 0, %s247
      %s251 = sphi 0, %s250
      %s267 = sphi 0, %s251
    $region4: #{tpu_custom_call.1} parent=1 // loop_header_branch
      %26 = sbr.rel (%p24) target = $region8
    $region5: #{tpu_custom_call.1} parent=1 // loop_body
      %s28 = ssub.s32 %s23, 1
      %s29 = ssub.s32 %s23, 2
      %s36 = sadd.s32 1, %s31
      %p37 = scmp.ge.s32.totalorder %s36, 2
      %s38 = scalar_select %p37, 0, %s36
      %s39 = sadd.s32 1, %s30
      %s40 = scalar_select %p37, %s39, %s30
      %p41 = scmp.ge.s32.totalorder %s40, 1
      %s42 = scalar_select %p41, 0, %s40
      %s43 = ssub.s32 %s30, %s42
      %p44 = scmp.eq.s32.totalorder %s43, 0
      %s46 = sadd.s32 %s45, 1
      %s47 = scalar_select %p44, %s45, %s46
      %p50 = pneg %p44
      %p51 = scmp.eq.s32.totalorder %s23, 1
      %p52 = por %p50, %p51
      %p53 = scmp.ne.s32.totalorder %s45, %s48
      %p54 = scmp.eq.s32.totalorder %s23, 0
      %p55 = por %p53, %p54
      %p56 = scmp.ne.s32.totalorder %s45, %s48
      %p57 = scmp.eq.s32.totalorder %s28, 1
      %p58 = por %p56, %p57
      %p59 = scmp.ne.s32.totalorder %s48, %s49
      %p60 = scmp.eq.s32.totalorder %s28, 0
      %p61 = por %p59, %p60
      %p62 = scmp.ne.s32.totalorder %s48, %s49
      %p63 = scmp.eq.s32.totalorder %s29, 1
      %p64 = por %p62, %p63
      %p66 = scmp.ne.s32.totalorder %s49, %s65
      %p67 = scmp.eq.s32.totalorder %s29, 0
      %p68 = por %p66, %p67
      %s69 = ssub.s32 %s31, %s38
      %s70 = ssub.s32 %s30, %s42
      %s71 = sor.u32 %s69, %s70
      %p72 = scmp.eq.s32.totalorder %s71, 0
      %s74 = sadd.s32 %s73, 1
      %s75 = scalar_select %p72, %s73, %s74
      %p78 = pneg %p72
      %p79 = scmp.eq.s32.totalorder %s23, 1
      %p80 = por %p78, %p79
      %p81 = scmp.ne.s32.totalorder %s73, %s76
      %p82 = scmp.eq.s32.totalorder %s23, 0
      %p83 = por %p81, %p82
      %p84 = scmp.ne.s32.totalorder %s73, %s76
      %p85 = scmp.eq.s32.totalorder %s28, 1
      %p86 = por %p84, %p85
      %p87 = scmp.ne.s32.totalorder %s76, %s77
      %p88 = scmp.eq.s32.totalorder %s28, 0
      %p89 = por %p87, %p88
      %p90 = scmp.ne.s32.totalorder %s76, %s77
      %p91 = scmp.eq.s32.totalorder %s29, 1
      %p92 = por %p90, %p91
      %p94 = scmp.ne.s32.totalorder %s77, %s93
      %p95 = scmp.eq.s32.totalorder %s29, 0
      %p96 = por %p94, %p95
      %s98 = sadd.s32 %s97, 1
      %p101 = scmp.eq.s32.totalorder %s23, 1
      %p102 = scmp.ne.s32.totalorder %s97, %s99
      %p103 = scmp.eq.s32.totalorder %s23, 0
      %p104 = por %p102, %p103
      %p105 = scmp.ne.s32.totalorder %s97, %s99
      %p106 = scmp.eq.s32.totalorder %s28, 1
      %p107 = por %p105, %p106
      %p108 = scmp.ne.s32.totalorder %s99, %s100
      %p109 = scmp.eq.s32.totalorder %s28, 0
      %p110 = por %p108, %p109
      %p111 = scmp.ne.s32.totalorder %s99, %s100
      %p112 = scmp.eq.s32.totalorder %s29, 1
      %p113 = por %p111, %p112
      %p115 = scmp.ne.s32.totalorder %s100, %s114
      %p116 = scmp.eq.s32.totalorder %s29, 0
      %p117 = por %p115, %p116
      %s119 = sadd.s32 %s118, 1
      %p122 = scmp.eq.s32.totalorder %s23, 1
      %p123 = scmp.ne.s32.totalorder %s118, %s120
      %p124 = scmp.eq.s32.totalorder %s23, 0
      %p125 = por %p123, %p124
      %p126 = scmp.ne.s32.totalorder %s118, %s120
      %p127 = scmp.eq.s32.totalorder %s28, 1
      %p128 = por %p126, %p127
      %p129 = scmp.ne.s32.totalorder %s120, %s121
      %p130 = scmp.eq.s32.totalorder %s28, 0
      %p131 = por %p129, %p130
      %p132 = scmp.ne.s32.totalorder %s120, %s121
      %p133 = scmp.eq.s32.totalorder %s29, 1
      %p134 = por %p132, %p133
      %p136 = scmp.ne.s32.totalorder %s121, %s135
      %p137 = scmp.eq.s32.totalorder %s29, 0
      %p138 = por %p136, %p137
      %s139 = ssub.s32 %s30, %s42
      %p140 = scmp.eq.s32.totalorder %s139, 0
      %s142 = sadd.s32 %s141, 1
      %s143 = scalar_select %p140, %s141, %s142
      %p146 = pneg %p140
      %p147 = scmp.eq.s32.totalorder %s23, 1
      %p148 = por %p146, %p147
      %p149 = scmp.ne.s32.totalorder %s141, %s144
      %p150 = scmp.eq.s32.totalorder %s23, 0
      %p151 = por %p149, %p150
      %p152 = scmp.ne.s32.totalorder %s141, %s144
      %p153 = scmp.eq.s32.totalorder %s28, 1
      %p154 = por %p152, %p153
      %p155 = scmp.ne.s32.totalorder %s144, %s145
      %p156 = scmp.eq.s32.totalorder %s28, 0
      %p157 = por %p155, %p156
      %p158 = scmp.ne.s32.totalorder %s144, %s145
      %p159 = scmp.eq.s32.totalorder %s29, 1
      %p160 = por %p158, %p159
      %p162 = scmp.ne.s32.totalorder %s145, %s161
      %p163 = scmp.eq.s32.totalorder %s29, 0
      %p164 = por %p162, %p163
      %s165 = ssub.s32 %s30, %s42
      %p166 = scmp.eq.s32.totalorder %s165, 0
      %s168 = sadd.s32 %s167, 1
      %s169 = scalar_select %p166, %s167, %s168
      %p172 = pneg %p166
      %p173 = scmp.eq.s32.totalorder %s23, 1
      %p174 = por %p172, %p173
      %p175 = scmp.ne.s32.totalorder %s167, %s170
      %p176 = scmp.eq.s32.totalorder %s23, 0
      %p177 = por %p175, %p176
      %p178 = scmp.ne.s32.totalorder %s167, %s170
      %p179 = scmp.eq.s32.totalorder %s28, 1
      %p180 = por %p178, %p179
      %p181 = scmp.ne.s32.totalorder %s170, %s171
      %p182 = scmp.eq.s32.totalorder %s28, 0
      %p183 = por %p181, %p182
      %p184 = scmp.ne.s32.totalorder %s170, %s171
      %p185 = scmp.eq.s32.totalorder %s29, 1
      %p186 = por %p184, %p185
      %p188 = scmp.ne.s32.totalorder %s171, %s187
      %p189 = scmp.eq.s32.totalorder %s29, 0
      %p190 = por %p188, %p189
      %s191 = ssub.s32 %s31, %s38
      %s192 = ssub.s32 %s30, %s42
      %s193 = sor.u32 %s191, %s192
      %p194 = scmp.eq.s32.totalorder %s193, 0
      %s196 = sadd.s32 %s195, 1
      %s197 = scalar_select %p194, %s195, %s196
      %p200 = pneg %p194
      %p201 = scmp.eq.s32.totalorder %s23, 1
      %p202 = por %p200, %p201
      %p203 = scmp.ne.s32.totalorder %s195, %s198
      %p204 = scmp.eq.s32.totalorder %s23, 0
      %p205 = por %p203, %p204
      %p206 = scmp.ne.s32.totalorder %s195, %s198
      %p207 = scmp.eq.s32.totalorder %s28, 1
      %p208 = por %p206, %p207
      %p209 = scmp.ne.s32.totalorder %s198, %s199
      %p210 = scmp.eq.s32.totalorder %s28, 0
      %p211 = por %p209, %p210
      %p212 = scmp.ne.s32.totalorder %s198, %s199
      %p213 = scmp.eq.s32.totalorder %s29, 1
      %p214 = por %p212, %p213
      %p216 = scmp.ne.s32.totalorder %s199, %s215
      %p217 = scmp.eq.s32.totalorder %s29, 0
      %p218 = por %p216, %p217
      %s219 = ssub.s32 %s30, %s42
      %p220 = scmp.eq.s32.totalorder %s219, 0
      %s222 = sadd.s32 %s221, 1
      %s223 = scalar_select %p220, %s221, %s222
      %p226 = pneg %p220
      %p227 = scmp.eq.s32.totalorder %s23, 1
      %p228 = por %p226, %p227
      %p229 = scmp.ne.s32.totalorder %s221, %s224
      %p230 = scmp.eq.s32.totalorder %s23, 0
      %p231 = por %p229, %p230
      %p232 = scmp.ne.s32.totalorder %s221, %s224
      %p233 = scmp.eq.s32.totalorder %s28, 1
      %p234 = por %p232, %p233
      %p235 = scmp.ne.s32.totalorder %s224, %s225
      %p236 = scmp.eq.s32.totalorder %s28, 0
      %p237 = por %p235, %p236
      %p238 = scmp.ne.s32.totalorder %s224, %s225
      %p239 = scmp.eq.s32.totalorder %s29, 1
      %p240 = por %p238, %p239
      %p242 = scmp.ne.s32.totalorder %s225, %s241
      %p243 = scmp.eq.s32.totalorder %s29, 0
      %p244 = por %p242, %p243
      %s245 = ssub.s32 %s30, %s42
      %p246 = scmp.eq.s32.totalorder %s245, 0
      %s248 = sadd.s32 %s247, 1
      %s249 = scalar_select %p246, %s247, %s248
      %p252 = pneg %p246
      %p253 = scmp.eq.s32.totalorder %s23, 1
      %p254 = por %p252, %p253
      %p255 = scmp.ne.s32.totalorder %s247, %s250
      %p256 = scmp.eq.s32.totalorder %s23, 0
      %p257 = por %p255, %p256
      %p258 = scmp.ne.s32.totalorder %s247, %s250
      %p259 = scmp.eq.s32.totalorder %s28, 1
      %p260 = por %p258, %p259
      %p261 = scmp.ne.s32.totalorder %s250, %s251
      %p262 = scmp.eq.s32.totalorder %s28, 0
      %p263 = por %p261, %p262
      %p264 = scmp.ne.s32.totalorder %s250, %s251
      %p265 = scmp.eq.s32.totalorder %s29, 1
      %p266 = por %p264, %p265
      %p268 = scmp.ne.s32.totalorder %s251, %s267
      %p269 = scmp.eq.s32.totalorder %s29, 0
      %p270 = por %p268, %p269
      %p271 = scmp.le.s32.totalorder 1, %s23
      %p272 = scmp.lt.s32.totalorder %s23, 3
      %p273 = pnand %p271, %p272
      %p274 = pneg %p273
      // Predicated region
      $region9: #{tpu_custom_call.1} parent=5 // pred_check
        _
      $region10: #{tpu_custom_call.1} parent=5 // pred_check_branch
        %276 = sbr.rel (%p273) target = $region12
      $region11: #{tpu_custom_call.1} parent=5 // pred_region
        %s277 = ssub.s32 %s23, 1
        // Predicated region
        $region13: #{tpu_custom_call.1} parent=11 // pred_check
          %p278 = pneg %p61
        $region14: #{tpu_custom_call.1} parent=11 // pred_check_branch
          %280 = sbr.rel (%p278) target = $region16
        $region15: #{tpu_custom_call.1} parent=11 // pred_region
          %p281 = scmp.lt.s32.totalorder %s32, 0
          %s282 = scalar_select %p281, %s32, 0
          %s283 = smul.addr %s282, 8
          %s284 = scalar_lea.vmem %s0, %s283
        $region16: #{tpu_custom_call.1} parent=11 // pred_fallthru
          _
        // Predicated region
        $region17: #{tpu_custom_call.1} parent=11 // pred_check
          %p285 = pneg %p110
        $region18: #{tpu_custom_call.1} parent=11 // pred_check_branch
          %287 = sbr.rel (%p285) target = $region20
        $region19: #{tpu_custom_call.1} parent=11 // pred_region
          %s289 = ssub.s32 8192, 8192
          %290 = vsyncadd [#allocation6], %s289
          %s291 = sshll.u32 [#allocation5], 4
          %s292 = int_to_ptr.vmem [resolvable:$true] %s291
          %297 = dma.hbm_to_vmem [thread:$0]  %s2, 8192, %s292, [#allocation6], 512, 512, 32
        $region20: #{tpu_custom_call.1} parent=11 // pred_fallthru
          _
        // Predicated region
        $region21: #{tpu_custom_call.1} parent=11 // pred_check
          %p298 = pneg %p131
        $region22: #{tpu_custom_call.1} parent=11 // pred_check_branch
          %300 = sbr.rel (%p298) target = $region24
        $region23: #{tpu_custom_call.1} parent=11 // pred_region
          %s302 = ssub.s32 2048, 2048
          %303 = vsyncadd [#allocation6], %s302
          %s304 = sshll.u32 [#allocation7], 4
          %s305 = int_to_ptr.vmem [resolvable:$true] %s304
          %310 = dma.hbm_to_vmem [thread:$0]  %s3, 2048, %s305, [#allocation6], 128, 128, 8
        $region24: #{tpu_custom_call.1} parent=11 // pred_fallthru
          _
        // Predicated region
        $region25: #{tpu_custom_call.1} parent=11 // pred_check
          %p311 = pneg %p157
        $region26: #{tpu_custom_call.1} parent=11 // pred_check_branch
          %313 = sbr.rel (%p311) target = $region28
        $region27: #{tpu_custom_call.1} parent=11 // pred_region
          %p314 = scmp.lt.s32.totalorder %s32, 0
          %s315 = scalar_select %p314, %s32, 0
          %s316 = smul.addr %s315, 8
          %s317 = scalar_lea.vmem %s4, %s316
        $region28: #{tpu_custom_call.1} parent=11 // pred_fallthru
          _
        // Predicated region
        $region29: #{tpu_custom_call.1} parent=11 // pred_check
          %p318 = pneg %p183
        $region30: #{tpu_custom_call.1} parent=11 // pred_check_branch
          %320 = sbr.rel (%p318) target = $region32
        $region31: #{tpu_custom_call.1} parent=11 // pred_region
          %p321 = scmp.lt.s32.totalorder %s32, 0
          %s322 = scalar_select %p321, %s32, 0
          %s323 = smul.addr %s322, 8
          %s324 = scalar_lea.vmem %s5, %s323
        $region32: #{tpu_custom_call.1} parent=11 // pred_fallthru
          _
      $region12: #{tpu_custom_call.1} parent=5 // pred_fallthru
        _
      %p325 = scmp.lt.s32.totalorder %s23, 2
      // Predicated region
      $region33: #{tpu_custom_call.1} parent=5 // pred_check
        %p326 = pneg %p325
      $region34: #{tpu_custom_call.1} parent=5 // pred_check_branch
        %328 = sbr.rel (%p326) target = $region36
      $region35: #{tpu_custom_call.1} parent=5 // pred_region
        // Predicated region
        $region37: #{tpu_custom_call.1} parent=35 // pred_check
          %p329 = pneg %p83
        $region38: #{tpu_custom_call.1} parent=35 // pred_check_branch
          %331 = sbr.rel (%p329) target = $region40
        $region39: #{tpu_custom_call.1} parent=35 // pred_region
          %s332 = sand.u32 %s73, 1
          %s333 = scalar_lea.sflag [#allocation3], %s332
          %s334 = sand.u32 %s73, 1
          %s335 = smul.addr %s334, 128
          %s336 = scalar_lea.vmem [#allocation2], %s335
          %s337 = smul.u32 4, %s31
          %s339 = ssub.s32 2048, 2048
          %340 = vsyncadd %s333, %s339
          %s341 = smul.addr %s30, 4
          %s342 = smul.addr %s337, 4
          %s343 = sadd.s32 %s341, %s342
          %s344 = smul.addr %s343, 128
          %s345 = scalar_lea.hbm %s1, %s344
          %s346 = sshll.u32 %s336, 4
          %s347 = int_to_ptr.vmem [resolvable:$true] %s346
          %352 = dma.hbm_to_vmem [thread:$0]  %s345, 2048, %s347, %s333, 512, 512, 32
        $region40: #{tpu_custom_call.1} parent=35 // pred_fallthru
          _
      $region36: #{tpu_custom_call.1} parent=5 // pred_fallthru
        _
      %p353 = scmp.le.s32.totalorder 1, %s23
      %p354 = scmp.lt.s32.totalorder %s23, 3
      %p355 = pnand %p353, %p354
      %p356 = pneg %p355
      // Predicated region
      $region41: #{tpu_custom_call.1} parent=5 // pred_check
        _
      $region42: #{tpu_custom_call.1} parent=5 // pred_check_branch
        %358 = sbr.rel (%p355) target = $region44
      $region43: #{tpu_custom_call.1} parent=5 // pred_region
        %s359 = ssub.s32 %s23, 1
        %s360 = sand.u32 %s76, 1
        %s361 = scalar_lea.sflag [#allocation3], %s360
        %s362 = sand.u32 %s76, 1
        %s363 = smul.addr %s362, 128
        %s364 = scalar_lea.vmem [#allocation2], %s363
        // Predicated region
        $region45: #{tpu_custom_call.1} parent=43 // pred_check
          %p365 = pneg %p89
        $region46: #{tpu_custom_call.1} parent=43 // pred_check_branch
          %367 = sbr.rel (%p365) target = $region48
        $region47: #{tpu_custom_call.1} parent=43 // pred_region
          %368 = dma.done %s361, 2048
        $region48: #{tpu_custom_call.1} parent=43 // pred_fallthru
          _
        // Predicated region
        $region49: #{tpu_custom_call.1} parent=43 // pred_check
          %p369 = pneg %p110
        $region50: #{tpu_custom_call.1} parent=43 // pred_check_branch
          %371 = sbr.rel (%p369) target = $region52
        $region51: #{tpu_custom_call.1} parent=43 // pred_region
          %372 = dma.done [#allocation6], 8192
        $region52: #{tpu_custom_call.1} parent=43 // pred_fallthru
          _
        // Predicated region
        $region53: #{tpu_custom_call.1} parent=43 // pred_check
          %p373 = pneg %p131
        $region54: #{tpu_custom_call.1} parent=43 // pred_check_branch
          %375 = sbr.rel (%p373) target = $region56
        $region55: #{tpu_custom_call.1} parent=43 // pred_region
          %376 = dma.done [#allocation6], 2048
        $region56: #{tpu_custom_call.1} parent=43 // pred_fallthru
          _
        %p377 = scmp.lt.s32.totalorder %s32, 0
        %s378 = scalar_select %p377, %s32, 0
        %s379 = smul.addr %s378, 8
        %s380 = scalar_lea.vmem %s0, %s379
        %p381 = pneg %p61
        %p382 = pneg %p58
        %s383 = sand.u32 %s76, 1
        %s384 = scalar_lea.sflag [#allocation3], %s383
        %s385 = sand.u32 %s76, 1
        %s386 = smul.addr %s385, 128
        %s387 = scalar_lea.vmem [#allocation2], %s386
        %p388 = pneg %p89
        %p389 = pneg %p86
        %p390 = pneg %p110
        %p391 = pneg %p107
        %p392 = pneg %p131
        %p393 = pneg %p128
        %p394 = scmp.lt.s32.totalorder %s32, 0
        %s395 = scalar_select %p394, %s32, 0
        %s396 = smul.addr %s395, 8
        %s397 = scalar_lea.vmem %s4, %s396
        %p398 = pneg %p157
        %p399 = pneg %p154
        %p400 = scmp.lt.s32.totalorder %s32, 0
        %s401 = scalar_select %p400, %s32, 0
        %s402 = smul.addr %s401, 8
        %s403 = scalar_lea.vmem %s5, %s402
        %p404 = pneg %p183
        %p405 = pneg %p180
        %p406 = pneg %p211
        %p407 = pneg %p208
        %s408 = sand.u32 %s198, 1
        %s409 = scalar_lea.sflag [#allocation4], %s408
        %s410 = sand.u32 %s198, 1
        %s411 = smul.addr %s410, 32
        %s412 = scalar_lea.vmem [#allocation8], %s411
        %p413 = pneg %p237
        %p414 = pneg %p234
        %p415 = pneg %p263
        %p416 = pneg %p260
        %p417 = scmp.lt.s32.totalorder %s32, 0
        %s418 = scalar_select %p417, %s32, 0
        %s419 = smul.addr %s418, 8
        %s420 = scalar_lea.vmem %s0, %s419
        %s421 = smul.u32 4, %s33
        %p422 = scmp.lt.s32.totalorder %s32, 0
        %s423 = scalar_select %p422, %s32, 0
        %s424 = smul.addr %s423, 8
        %s425 = scalar_lea.vmem %s4, %s424
        %p426 = scmp.lt.s32.totalorder %s32, 0
        %s427 = scalar_select %p426, %s32, 0
        %s428 = smul.addr %s427, 8
        %s429 = scalar_lea.vmem %s5, %s428
        %s430 = smul.u32 4, %s33
        %p431 = scmp.eq.s32.totalorder %s33, 0
        // Predicated region
        $region57: #{tpu_custom_call.1} parent=43 // pred_check
          %p432 = pneg %p431
        $region58: #{tpu_custom_call.1} parent=43 // pred_check_branch
          %434 = sbr.rel (%p432) target = $region60
        $region59: #{tpu_custom_call.1} parent=43 // pred_region
          %v435 = vld [vmem:[%s425] sm:$0xff]
          %436 = vst [vmem:[#allocation9] sm:$0xff] %v435
          %v437 = vld [vmem:[%s429] sm:$0xff]
          %438 = vst [vmem:[#allocation11] sm:$0xff] %v437
        $region60: #{tpu_custom_call.1} parent=43 // pred_fallthru
          _
        %v439 = vld [vmem:[%s420] sm:$0xff]
        %s440 = smul.u32 %s33, 4
        %v441 = vld [vmem:[#allocation9] sm:$0xff]
        %v442 = vld [vmem:[#allocation11] sm:$0xff]
        %v443 = vld [vmem:[%s364] sm:$0xff]
        %v444 = vld [vmem:[%s364 + $0x8] sm:$0xff]
        %v445 = vld [vmem:[%s364 + $0x10] sm:$0xff]
        %v446 = vld [vmem:[%s364 + $0x18] sm:$0xff]
        %v447 = vld [vmem:[#allocation5] sm:$0xff]
        %v448 = vld [vmem:[#allocation5 + $0x8] sm:$0xff]
        %v449 = vld [vmem:[#allocation5 + $0x10] sm:$0xff]
        %v450 = vld [vmem:[#allocation5 + $0x18] sm:$0xff]
        %v451 = vld [vmem:[#allocation5 + $0x20] sm:$0xff]
        %v452 = vld [vmem:[#allocation5 + $0x28] sm:$0xff]
        %v453 = vld [vmem:[#allocation5 + $0x30] sm:$0xff]
        %v454 = vld [vmem:[#allocation5 + $0x38] sm:$0xff]
        %v455 = vld [vmem:[#allocation5 + $0x40] sm:$0xff]
        %v456 = vld [vmem:[#allocation5 + $0x48] sm:$0xff]
        %v457 = vld [vmem:[#allocation5 + $0x50] sm:$0xff]
        %v458 = vld [vmem:[#allocation5 + $0x58] sm:$0xff]
        %v459 = vld [vmem:[#allocation5 + $0x60] sm:$0xff]
        %v460 = vld [vmem:[#allocation5 + $0x68] sm:$0xff]
        %v461 = vld [vmem:[#allocation5 + $0x70] sm:$0xff]
        %v462 = vld [vmem:[#allocation5 + $0x78] sm:$0xff]
        %v463 = vld [vmem:[#allocation5 + $0x80] sm:$0xff]
        %v464 = vld [vmem:[#allocation5 + $0x88] sm:$0xff]
        %v465 = vld [vmem:[#allocation5 + $0x90] sm:$0xff]
        %v466 = vld [vmem:[#allocation5 + $0x98] sm:$0xff]
        %v467 = vld [vmem:[#allocation5 + $0xa0] sm:$0xff]
        %v468 = vld [vmem:[#allocation5 + $0xa8] sm:$0xff]
        %v469 = vld [vmem:[#allocation5 + $0xb0] sm:$0xff]
        %v470 = vld [vmem:[#allocation5 + $0xb8] sm:$0xff]
        %v471 = vld [vmem:[#allocation5 + $0xc0] sm:$0xff]
        %v472 = vld [vmem:[#allocation5 + $0xc8] sm:$0xff]
        %v473 = vld [vmem:[#allocation5 + $0xd0] sm:$0xff]
        %v474 = vld [vmem:[#allocation5 + $0xd8] sm:$0xff]
        %v475 = vld [vmem:[#allocation5 + $0xe0] sm:$0xff]
        %v476 = vld [vmem:[#allocation5 + $0xe8] sm:$0xff]
        %v477 = vld [vmem:[#allocation5 + $0xf0] sm:$0xff]
        %v478 = vld [vmem:[#allocation5 + $0xf8] sm:$0xff]
        %v479 = vld [vmem:[#allocation5 + $0x100] sm:$0xff]
        %v480 = vld [vmem:[#allocation5 + $0x108] sm:$0xff]
        %v481 = vld [vmem:[#allocation5 + $0x110] sm:$0xff]
        %v482 = vld [vmem:[#allocation5 + $0x118] sm:$0xff]
        %v483 = vld [vmem:[#allocation5 + $0x120] sm:$0xff]
        %v484 = vld [vmem:[#allocation5 + $0x128] sm:$0xff]
        %v485 = vld [vmem:[#allocation5 + $0x130] sm:$0xff]
        %v486 = vld [vmem:[#allocation5 + $0x138] sm:$0xff]
        %v487 = vld [vmem:[#allocation5 + $0x140] sm:$0xff]
        %v488 = vld [vmem:[#allocation5 + $0x148] sm:$0xff]
        %v489 = vld [vmem:[#allocation5 + $0x150] sm:$0xff]
        %v490 = vld [vmem:[#allocation5 + $0x158] sm:$0xff]
        %v491 = vld [vmem:[#allocation5 + $0x160] sm:$0xff]
        %v492 = vld [vmem:[#allocation5 + $0x168] sm:$0xff]
        %v493 = vld [vmem:[#allocation5 + $0x170] sm:$0xff]
        %v494 = vld [vmem:[#allocation5 + $0x178] sm:$0xff]
        %v495 = vld [vmem:[#allocation5 + $0x180] sm:$0xff]
        %v496 = vld [vmem:[#allocation5 + $0x188] sm:$0xff]
        %v497 = vld [vmem:[#allocation5 + $0x190] sm:$0xff]
        %v498 = vld [vmem:[#allocation5 + $0x198] sm:$0xff]
        %v499 = vld [vmem:[#allocation5 + $0x1a0] sm:$0xff]
        %v500 = vld [vmem:[#allocation5 + $0x1a8] sm:$0xff]
        %v501 = vld [vmem:[#allocation5 + $0x1b0] sm:$0xff]
        %v502 = vld [vmem:[#allocation5 + $0x1b8] sm:$0xff]
        %v503 = vld [vmem:[#allocation5 + $0x1c0] sm:$0xff]
        %v504 = vld [vmem:[#allocation5 + $0x1c8] sm:$0xff]
        %v505 = vld [vmem:[#allocation5 + $0x1d0] sm:$0xff]
        %v506 = vld [vmem:[#allocation5 + $0x1d8] sm:$0xff]
        %v507 = vld [vmem:[#allocation5 + $0x1e0] sm:$0xff]
        %v508 = vld [vmem:[#allocation5 + $0x1e8] sm:$0xff]
        %v509 = vld [vmem:[#allocation5 + $0x1f0] sm:$0xff]
        %v510 = vld [vmem:[#allocation5 + $0x1f8] sm:$0xff]
        %511 = vmatprep.subr.mxu0 %v508
        %512 = vmatpush1.msra.mxu0 %v507
        %513 = vmatprep.subr.mxu0 %v504
        %514 = vmatpush1.msra.mxu0 %v503
        %515 = vmatprep.subr.mxu0 %v500
        %516 = vmatpush1.msra.mxu0 %v499
        %517 = vmatprep.subr.mxu0 %v496
        %518 = vmatpush1.msra.mxu0 %v495
        %519 = vmatprep.subr.mxu0 %v492
        %520 = vmatpush1.msra.mxu0 %v491
        %521 = vmatprep.subr.mxu0 %v488
        %522 = vmatpush1.msra.mxu0 %v487
        %523 = vmatprep.subr.mxu0 %v484
        %524 = vmatpush1.msra.mxu0 %v483
        %525 = vmatprep.subr.mxu0 %v480
        %526 = vmatpush1.msra.mxu0 %v479
        %527 = vmatprep.subr.mxu0 %v476
        %528 = vmatpush1.msra.mxu0 %v475
        %529 = vmatprep.subr.mxu0 %v472
        %530 = vmatpush1.msra.mxu0 %v471
        %531 = vmatprep.subr.mxu0 %v468
        %532 = vmatpush1.msra.mxu0 %v467
        %533 = vmatprep.subr.mxu0 %v464
        %534 = vmatpush1.msra.mxu0 %v463
        %535 = vmatprep.subr.mxu0 %v460
        %536 = vmatpush1.msra.mxu0 %v459
        %537 = vmatprep.subr.mxu0 %v456
        %538 = vmatpush1.msra.mxu0 %v455
        %539 = vmatprep.subr.mxu0 %v452
        %540 = vmatpush1.msra.mxu0 %v451
        %541 = vmatprep.subr.mxu0 %v448
        %542 = vmatpush1.msra.mxu0 %v447
        %543 = vmatprep.subr.mxu0 0.0
        %544 = vmatpush2.msra.mxu0 0.0
        %545 = vmatprep.subr.mxu0 0.0
        %546 = vmatpush2.msra.mxu0 0.0
        %547 = vmatprep.subr.mxu0 0.0
        %548 = vmatpush2.msra.mxu0 0.0
        %549 = vmatprep.subr.mxu0 0.0
        %550 = vmatpush2.msra.mxu0 0.0
        %551 = vmatprep.subr.mxu0 0.0
        %552 = vmatpush2.msra.mxu0 0.0
        %553 = vmatprep.subr.mxu0 0.0
        %554 = vmatpush2.msra.mxu0 0.0
        %555 = vmatprep.subr.mxu0 0.0
        %556 = vmatpush2.msra.mxu0 0.0
        %557 = vmatprep.subr.mxu0 0.0
        %558 = vmatpush2.msra.mxu0 0.0
        %559 = vmatprep.subr.mxu0 0.0
        %560 = vmatpush2.msra.mxu0 0.0
        %561 = vmatprep.subr.mxu0 0.0
        %562 = vmatpush2.msra.mxu0 0.0
        %563 = vmatprep.subr.mxu0 0.0
        %564 = vmatpush2.msra.mxu0 0.0
        %565 = vmatprep.subr.mxu0 0.0
        %566 = vmatpush2.msra.mxu0 0.0
        %567 = vmatprep.subr.mxu0 0.0
        %568 = vmatpush2.msra.mxu0 0.0
        %569 = vmatprep.subr.mxu0 0.0
        %570 = vmatpush2.msra.mxu0 0.0
        %571 = vmatprep.subr.mxu0 0.0
        %572 = vmatpush2.msra.mxu0 0.0
        %573 = vmatprep.subr.mxu0 0.0
        %574 = vmatpush2.msra.mxu0 0.0
        %575 = vmatprep.mubr.f32.mxu0 0.0
        %576 = vmatmul.mubr.f32.gmra.mxu0 %v441
        %v577 = vpop.f32.mrf.mxu0
        %v578 = vadd.f32 0.0, %v577
        %v579 = vpop.f32.mrf.mxu0
        %v580 = vadd.f32 0.0, %v579
        %581 = vdwg.mxu0
        %582 = vmatprep.subr.mxu0 %v510
        %583 = vmatpush1.msra.mxu0 %v509
        %584 = vmatprep.subr.mxu0 %v506
        %585 = vmatpush1.msra.mxu0 %v505
        %586 = vmatprep.subr.mxu0 %v502
        %587 = vmatpush1.msra.mxu0 %v501
        %588 = vmatprep.subr.mxu0 %v498
        %589 = vmatpush1.msra.mxu0 %v497
        %590 = vmatprep.subr.mxu0 %v494
        %591 = vmatpush1.msra.mxu0 %v493
        %592 = vmatprep.subr.mxu0 %v490
        %593 = vmatpush1.msra.mxu0 %v489
        %594 = vmatprep.subr.mxu0 %v486
        %595 = vmatpush1.msra.mxu0 %v485
        %596 = vmatprep.subr.mxu0 %v482
        %597 = vmatpush1.msra.mxu0 %v481
        %598 = vmatprep.subr.mxu0 %v478
        %599 = vmatpush1.msra.mxu0 %v477
        %600 = vmatprep.subr.mxu0 %v474
        %601 = vmatpush1.msra.mxu0 %v473
        %602 = vmatprep.subr.mxu0 %v470
        %603 = vmatpush1.msra.mxu0 %v469
        %604 = vmatprep.subr.mxu0 %v466
        %605 = vmatpush1.msra.mxu0 %v465
        %606 = vmatprep.subr.mxu0 %v462
        %607 = vmatpush1.msra.mxu0 %v461
        %608 = vmatprep.subr.mxu0 %v458
        %609 = vmatpush1.msra.mxu0 %v457
        %610 = vmatprep.subr.mxu0 %v454
        %611 = vmatpush1.msra.mxu0 %v453
        %612 = vmatprep.subr.mxu0 %v450
        %613 = vmatpush1.msra.mxu0 %v449
        %614 = vmatprep.subr.mxu0 0.0
        %615 = vmatpush2.msra.mxu0 0.0
        %616 = vmatprep.subr.mxu0 0.0
        %617 = vmatpush2.msra.mxu0 0.0
        %618 = vmatprep.subr.mxu0 0.0
        %619 = vmatpush2.msra.mxu0 0.0
        %620 = vmatprep.subr.mxu0 0.0
        %621 = vmatpush2.msra.mxu0 0.0
        %622 = vmatprep.subr.mxu0 0.0
        %623 = vmatpush2.msra.mxu0 0.0
        %624 = vmatprep.subr.mxu0 0.0
        %625 = vmatpush2.msra.mxu0 0.0
        %626 = vmatprep.subr.mxu0 0.0
        %627 = vmatpush2.msra.mxu0 0.0
        %628 = vmatprep.subr.mxu0 0.0
        %629 = vmatpush2.msra.mxu0 0.0
        %630 = vmatprep.subr.mxu0 0.0
        %631 = vmatpush2.msra.mxu0 0.0
        %632 = vmatprep.subr.mxu0 0.0
        %633 = vmatpush2.msra.mxu0 0.0
        %634 = vmatprep.subr.mxu0 0.0
        %635 = vmatpush2.msra.mxu0 0.0
        %636 = vmatprep.subr.mxu0 0.0
        %637 = vmatpush2.msra.mxu0 0.0
        %638 = vmatprep.subr.mxu0 0.0
        %639 = vmatpush2.msra.mxu0 0.0
        %640 = vmatprep.subr.mxu0 0.0
        %641 = vmatpush2.msra.mxu0 0.0
        %642 = vmatprep.subr.mxu0 0.0
        %643 = vmatpush2.msra.mxu0 0.0
        %644 = vmatprep.subr.mxu0 0.0
        %645 = vmatpush2.msra.mxu0 0.0
        %646 = vmatprep.mubr.f32.mxu0 0.0
        %647 = vmatmul.mubr.f32.gmra.mxu0 %v441
        %v648 = vpop.f32.mrf.mxu0
        %v649 = vadd.f32 0.0, %v648
        %v650 = vpop.f32.mrf.mxu0
        %v651 = vadd.f32 0.0, %v650
        %652 = vdwg.mxu0
        %v653 = vadd.f32 %v443, %v578
        %v654 = vadd.f32 %v444, %v580
        %v655 = vadd.f32 %v445, %v649
        %v656 = vadd.f32 %v446, %v651
        %v657 = vxor.u32 %v653, 2147483648
        %v658 = vmul.f32 %v657, 1.442695
        %v659 = vpow.pop %v658
        %v660 = vadd.f32 %v659, 1.0
        %v661 = vrcp.pop %v660
        %v662 = vmul.f32 1.0, %v661
        %v663 = vxor.u32 %v654, 2147483648
        %v664 = vmul.f32 %v663, 1.442695
        %v665 = vpow.pop %v664
        %v666 = vadd.f32 %v665, 1.0
        %v667 = vrcp.pop %v666
        %v668 = vmul.f32 1.0, %v667
        %v669 = vtanh.pop %v655
        %v670 = vxor.u32 %v656, 2147483648
        %v671 = vmul.f32 %v670, 1.442695
        %v672 = vpow.pop %v671
        %v673 = vadd.f32 %v672, 1.0
        %v674 = vrcp.pop %v673
        %v675 = vmul.f32 1.0, %v674
        %v676 = vmul.f32 %v662, %v669
        %v677 = vmul.f32 %v668, %v442
        %v678 = vadd.f32 %v676, %v677
        %v679 = vmax.f32 %v678, -3.0
        %v680 = vmin.f32 %v679, 3.0
        %v681 = vtanh.pop %v680
        %v682 = vmul.f32 %v675, %v681
        %v683 = vld [vmem:[#allocation7] sm:$0xff]
        %v684 = vld [vmem:[#allocation7 + $0x8] sm:$0xff]
        %v685 = vld [vmem:[#allocation7 + $0x10] sm:$0xff]
        %v686 = vld [vmem:[#allocation7 + $0x18] sm:$0xff]
        %v687 = vld [vmem:[#allocation7 + $0x20] sm:$0xff]
        %v688 = vld [vmem:[#allocation7 + $0x28] sm:$0xff]
        %v689 = vld [vmem:[#allocation7 + $0x30] sm:$0xff]
        %v690 = vld [vmem:[#allocation7 + $0x38] sm:$0xff]
        %v691 = vld [vmem:[#allocation7 + $0x40] sm:$0xff]
        %v692 = vld [vmem:[#allocation7 + $0x48] sm:$0xff]
        %v693 = vld [vmem:[#allocation7 + $0x50] sm:$0xff]
        %v694 = vld [vmem:[#allocation7 + $0x58] sm:$0xff]
        %v695 = vld [vmem:[#allocation7 + $0x60] sm:$0xff]
        %v696 = vld [vmem:[#allocation7 + $0x68] sm:$0xff]
        %v697 = vld [vmem:[#allocation7 + $0x70] sm:$0xff]
        %v698 = vld [vmem:[#allocation7 + $0x78] sm:$0xff]
        %699 = vmatprep.subr.mxu0 0.0
        %700 = vmatpush1.msra.mxu0 %v698
        %701 = vmatprep.subr.mxu0 0.0
        %702 = vmatpush1.msra.mxu0 %v697
        %703 = vmatprep.subr.mxu0 0.0
        %704 = vmatpush1.msra.mxu0 %v696
        %705 = vmatprep.subr.mxu0 0.0
        %706 = vmatpush1.msra.mxu0 %v695
        %707 = vmatprep.subr.mxu0 0.0
        %708 = vmatpush1.msra.mxu0 %v694
        %709 = vmatprep.subr.mxu0 0.0
        %710 = vmatpush1.msra.mxu0 %v693
        %711 = vmatprep.subr.mxu0 0.0
        %712 = vmatpush1.msra.mxu0 %v692
        %713 = vmatprep.subr.mxu0 0.0
        %714 = vmatpush1.msra.mxu0 %v691
        %715 = vmatprep.subr.mxu0 0.0
        %716 = vmatpush1.msra.mxu0 %v690
        %717 = vmatprep.subr.mxu0 0.0
        %718 = vmatpush1.msra.mxu0 %v689
        %719 = vmatprep.subr.mxu0 0.0
        %720 = vmatpush1.msra.mxu0 %v688
        %721 = vmatprep.subr.mxu0 0.0
        %722 = vmatpush1.msra.mxu0 %v687
        %723 = vmatprep.subr.mxu0 0.0
        %724 = vmatpush1.msra.mxu0 %v686
        %725 = vmatprep.subr.mxu0 0.0
        %726 = vmatpush1.msra.mxu0 %v685
        %727 = vmatprep.subr.mxu0 0.0
        %728 = vmatpush1.msra.mxu0 %v684
        %729 = vmatprep.subr.mxu0 0.0
        %730 = vmatpush1.msra.mxu0 %v683
        %731 = vmatprep.subr.mxu0 0.0
        %732 = vmatpush2.msra.mxu0 0.0
        %733 = vmatprep.subr.mxu0 0.0
        %734 = vmatpush2.msra.mxu0 0.0
        %735 = vmatprep.subr.mxu0 0.0
        %736 = vmatpush2.msra.mxu0 0.0
        %737 = vmatprep.subr.mxu0 0.0
        %738 = vmatpush2.msra.mxu0 0.0
        %739 = vmatprep.subr.mxu0 0.0
        %740 = vmatpush2.msra.mxu0 0.0
        %741 = vmatprep.subr.mxu0 0.0
        %742 = vmatpush2.msra.mxu0 0.0
        %743 = vmatprep.subr.mxu0 0.0
        %744 = vmatpush2.msra.mxu0 0.0
        %745 = vmatprep.subr.mxu0 0.0
        %746 = vmatpush2.msra.mxu0 0.0
        %747 = vmatprep.subr.mxu0 0.0
        %748 = vmatpush2.msra.mxu0 0.0
        %749 = vmatprep.subr.mxu0 0.0
        %750 = vmatpush2.msra.mxu0 0.0
        %751 = vmatprep.subr.mxu0 0.0
        %752 = vmatpush2.msra.mxu0 0.0
        %753 = vmatprep.subr.mxu0 0.0
        %754 = vmatpush2.msra.mxu0 0.0
        %755 = vmatprep.subr.mxu0 0.0
        %756 = vmatpush2.msra.mxu0 0.0
        %757 = vmatprep.subr.mxu0 0.0
        %758 = vmatpush2.msra.mxu0 0.0
        %759 = vmatprep.subr.mxu0 0.0
        %760 = vmatpush2.msra.mxu0 0.0
        %761 = vmatprep.subr.mxu0 0.0
        %762 = vmatpush2.msra.mxu0 0.0
        %763 = vmatprep.mubr.f32.mxu0 0.0
        %764 = vmatmul.mubr.f32.gmra.mxu0 %v682
        %v765 = vpop.f32.mrf.mxu0
        %v766 = vadd.f32 0.0, %v765
        %v767 = vpop.f32.mrf.mxu0
        %768 = vdwg.mxu0
        %v769 = vmax.f32 %v766, -3.0
        %v770 = vmin.f32 %v769, 3.0
        %v771 = vstv %s440
        %vm772 = vcmp.lt.s32.totalorder %v771, %v439
        %v773 = vsel %vm772, 1, 0
        %774 = vset.pattern.permute.xlu0 0
        %775 = vperm.xlu0 %774, %v773
        %v776 = vpop.permute.xlu0 %775
        %vm777 = vcmp.eq.s32.totalorder %v776, 1
        %v778 = vsel %vm777, %v680, %v442
        %v779 = vsel %vm777, %v770, %v441
        %v780 = vsel %vm777, %v770, 0.0
        %781 = vst [vmem:[%s412] sm:$0xff] %v780
        %s782 = scalar_lea.vmem %s364, 32 [#allocation2]
        %v783 = vld [vmem:[%s782] sm:$0xff]
        %v784 = vld [vmem:[%s782 + $0x8] sm:$0xff]
        %v785 = vld [vmem:[%s782 + $0x10] sm:$0xff]
        %v786 = vld [vmem:[%s782 + $0x18] sm:$0xff]
        %v787 = vld [vmem:[#allocation5] sm:$0xff]
        %v788 = vld [vmem:[#allocation5 + $0x8] sm:$0xff]
        %v789 = vld [vmem:[#allocation5 + $0x10] sm:$0xff]
        %v790 = vld [vmem:[#allocation5 + $0x18] sm:$0xff]
        %v791 = vld [vmem:[#allocation5 + $0x20] sm:$0xff]
        %v792 = vld [vmem:[#allocation5 + $0x28] sm:$0xff]
        %v793 = vld [vmem:[#allocation5 + $0x30] sm:$0xff]
        %v794 = vld [vmem:[#allocation5 + $0x38] sm:$0xff]
        %v795 = vld [vmem:[#allocation5 + $0x40] sm:$0xff]
        %v796 = vld [vmem:[#allocation5 + $0x48] sm:$0xff]
        %v797 = vld [vmem:[#allocation5 + $0x50] sm:$0xff]
        %v798 = vld [vmem:[#allocation5 + $0x58] sm:$0xff]
        %v799 = vld [vmem:[#allocation5 + $0x60] sm:$0xff]
        %v800 = vld [vmem:[#allocation5 + $0x68] sm:$0xff]
        %v801 = vld [vmem:[#allocation5 + $0x70] sm:$0xff]
        %v802 = vld [vmem:[#allocation5 + $0x78] sm:$0xff]
        %v803 = vld [vmem:[#allocation5 + $0x80] sm:$0xff]
        %v804 = vld [vmem:[#allocation5 + $0x88] sm:$0xff]
        %v805 = vld [vmem:[#allocation5 + $0x90] sm:$0xff]
        %v806 = vld [vmem:[#allocation5 + $0x98] sm:$0xff]
        %v807 = vld [vmem:[#allocation5 + $0xa0] sm:$0xff]
        %v808 = vld [vmem:[#allocation5 + $0xa8] sm:$0xff]
        %v809 = vld [vmem:[#allocation5 + $0xb0] sm:$0xff]
        %v810 = vld [vmem:[#allocation5 + $0xb8] sm:$0xff]
        %v811 = vld [vmem:[#allocation5 + $0xc0] sm:$0xff]
        %v812 = vld [vmem:[#allocation5 + $0xc8] sm:$0xff]
        %v813 = vld [vmem:[#allocation5 + $0xd0] sm:$0xff]
        %v814 = vld [vmem:[#allocation5 + $0xd8] sm:$0xff]
        %v815 = vld [vmem:[#allocation5 + $0xe0] sm:$0xff]
        %v816 = vld [vmem:[#allocation5 + $0xe8] sm:$0xff]
        %v817 = vld [vmem:[#allocation5 + $0xf0] sm:$0xff]
        %v818 = vld [vmem:[#allocation5 + $0xf8] sm:$0xff]
        %v819 = vld [vmem:[#allocation5 + $0x100] sm:$0xff]
        %v820 = vld [vmem:[#allocation5 + $0x108] sm:$0xff]
        %v821 = vld [vmem:[#allocation5 + $0x110] sm:$0xff]
        %v822 = vld [vmem:[#allocation5 + $0x118] sm:$0xff]
        %v823 = vld [vmem:[#allocation5 + $0x120] sm:$0xff]
        %v824 = vld [vmem:[#allocation5 + $0x128] sm:$0xff]
        %v825 = vld [vmem:[#allocation5 + $0x130] sm:$0xff]
        %v826 = vld [vmem:[#allocation5 + $0x138] sm:$0xff]
        %v827 = vld [vmem:[#allocation5 + $0x140] sm:$0xff]
        %v828 = vld [vmem:[#allocation5 + $0x148] sm:$0xff]
        %v829 = vld [vmem:[#allocation5 + $0x150] sm:$0xff]
        %v830 = vld [vmem:[#allocation5 + $0x158] sm:$0xff]
        %v831 = vld [vmem:[#allocation5 + $0x160] sm:$0xff]
        %v832 = vld [vmem:[#allocation5 + $0x168] sm:$0xff]
        %v833 = vld [vmem:[#allocation5 + $0x170] sm:$0xff]
        %v834 = vld [vmem:[#allocation5 + $0x178] sm:$0xff]
        %v835 = vld [vmem:[#allocation5 + $0x180] sm:$0xff]
        %v836 = vld [vmem:[#allocation5 + $0x188] sm:$0xff]
        %v837 = vld [vmem:[#allocation5 + $0x190] sm:$0xff]
        %v838 = vld [vmem:[#allocation5 + $0x198] sm:$0xff]
        %v839 = vld [vmem:[#allocation5 + $0x1a0] sm:$0xff]
        %v840 = vld [vmem:[#allocation5 + $0x1a8] sm:$0xff]
        %v841 = vld [vmem:[#allocation5 + $0x1b0] sm:$0xff]
        %v842 = vld [vmem:[#allocation5 + $0x1b8] sm:$0xff]
        %v843 = vld [vmem:[#allocation5 + $0x1c0] sm:$0xff]
        %v844 = vld [vmem:[#allocation5 + $0x1c8] sm:$0xff]
        %v845 = vld [vmem:[#allocation5 + $0x1d0] sm:$0xff]
        %v846 = vld [vmem:[#allocation5 + $0x1d8] sm:$0xff]
        %v847 = vld [vmem:[#allocation5 + $0x1e0] sm:$0xff]
        %v848 = vld [vmem:[#allocation5 + $0x1e8] sm:$0xff]
        %v849 = vld [vmem:[#allocation5 + $0x1f0] sm:$0xff]
        %v850 = vld [vmem:[#allocation5 + $0x1f8] sm:$0xff]
        %851 = vmatprep.subr.mxu0 %v848
        %852 = vmatpush1.msra.mxu0 %v847
        %853 = vmatprep.subr.mxu0 %v844
        %854 = vmatpush1.msra.mxu0 %v843
        %855 = vmatprep.subr.mxu0 %v840
        %856 = vmatpush1.msra.mxu0 %v839
        %857 = vmatprep.subr.mxu0 %v836
        %858 = vmatpush1.msra.mxu0 %v835
        %859 = vmatprep.subr.mxu0 %v832
        %860 = vmatpush1.msra.mxu0 %v831
        %861 = vmatprep.subr.mxu0 %v828
        %862 = vmatpush1.msra.mxu0 %v827
        %863 = vmatprep.subr.mxu0 %v824
        %864 = vmatpush1.msra.mxu0 %v823
        %865 = vmatprep.subr.mxu0 %v820
        %866 = vmatpush1.msra.mxu0 %v819
        %867 = vmatprep.subr.mxu0 %v816
        %868 = vmatpush1.msra.mxu0 %v815
        %869 = vmatprep.subr.mxu0 %v812
        %870 = vmatpush1.msra.mxu0 %v811
        %871 = vmatprep.subr.mxu0 %v808
        %872 = vmatpush1.msra.mxu0 %v807
        %873 = vmatprep.subr.mxu0 %v804
        %874 = vmatpush1.msra.mxu0 %v803
        %875 = vmatprep.subr.mxu0 %v800
        %876 = vmatpush1.msra.mxu0 %v799
        %877 = vmatprep.subr.mxu0 %v796
        %878 = vmatpush1.msra.mxu0 %v795
        %879 = vmatprep.subr.mxu0 %v792
        %880 = vmatpush1.msra.mxu0 %v791
        %881 = vmatprep.subr.mxu0 %v788
        %882 = vmatpush1.msra.mxu0 %v787
        %883 = vmatprep.subr.mxu0 0.0
        %884 = vmatpush2.msra.mxu0 0.0
        %885 = vmatprep.subr.mxu0 0.0
        %886 = vmatpush2.msra.mxu0 0.0
        %887 = vmatprep.subr.mxu0 0.0
        %888 = vmatpush2.msra.mxu0 0.0
        %889 = vmatprep.subr.mxu0 0.0
        %890 = vmatpush2.msra.mxu0 0.0
        %891 = vmatprep.subr.mxu0 0.0
        %892 = vmatpush2.msra.mxu0 0.0
        %893 = vmatprep.subr.mxu0 0.0
        %894 = vmatpush2.msra.mxu0 0.0
        %895 = vmatprep.subr.mxu0 0.0
        %896 = vmatpush2.msra.mxu0 0.0
        %897 = vmatprep.subr.mxu0 0.0
        %898 = vmatpush2.msra.mxu0 0.0
        %899 = vmatprep.subr.mxu0 0.0
        %900 = vmatpush2.msra.mxu0 0.0
        %901 = vmatprep.subr.mxu0 0.0
        %902 = vmatpush2.msra.mxu0 0.0
        %903 = vmatprep.subr.mxu0 0.0
        %904 = vmatpush2.msra.mxu0 0.0
        %905 = vmatprep.subr.mxu0 0.0
        %906 = vmatpush2.msra.mxu0 0.0
        %907 = vmatprep.subr.mxu0 0.0
        %908 = vmatpush2.msra.mxu0 0.0
        %909 = vmatprep.subr.mxu0 0.0
        %910 = vmatpush2.msra.mxu0 0.0
        %911 = vmatprep.subr.mxu0 0.0
        %912 = vmatpush2.msra.mxu0 0.0
        %913 = vmatprep.subr.mxu0 0.0
        %914 = vmatpush2.msra.mxu0 0.0
        %915 = vmatprep.mubr.f32.mxu0 0.0
        %916 = vmatmul.mubr.f32.gmra.mxu0 %v779
        %v917 = vpop.f32.mrf.mxu0
        %v918 = vadd.f32 0.0, %v917
        %v919 = vpop.f32.mrf.mxu0
        %v920 = vadd.f32 0.0, %v919
        %921 = vdwg.mxu0
        %922 = vmatprep.subr.mxu0 %v850
        %923 = vmatpush1.msra.mxu0 %v849
        %924 = vmatprep.subr.mxu0 %v846
        %925 = vmatpush1.msra.mxu0 %v845
        %926 = vmatprep.subr.mxu0 %v842
        %927 = vmatpush1.msra.mxu0 %v841
        %928 = vmatprep.subr.mxu0 %v838
        %929 = vmatpush1.msra.mxu0 %v837
        %930 = vmatprep.subr.mxu0 %v834
        %931 = vmatpush1.msra.mxu0 %v833
        %932 = vmatprep.subr.mxu0 %v830
        %933 = vmatpush1.msra.mxu0 %v829
        %934 = vmatprep.subr.mxu0 %v826
        %935 = vmatpush1.msra.mxu0 %v825
        %936 = vmatprep.subr.mxu0 %v822
        %937 = vmatpush1.msra.mxu0 %v821
        %938 = vmatprep.subr.mxu0 %v818
        %939 = vmatpush1.msra.mxu0 %v817
        %940 = vmatprep.subr.mxu0 %v814
        %941 = vmatpush1.msra.mxu0 %v813
        %942 = vmatprep.subr.mxu0 %v810
        %943 = vmatpush1.msra.mxu0 %v809
        %944 = vmatprep.subr.mxu0 %v806
        %945 = vmatpush1.msra.mxu0 %v805
        %946 = vmatprep.subr.mxu0 %v802
        %947 = vmatpush1.msra.mxu0 %v801
        %948 = vmatprep.subr.mxu0 %v798
        %949 = vmatpush1.msra.mxu0 %v797
        %950 = vmatprep.subr.mxu0 %v794
        %951 = vmatpush1.msra.mxu0 %v793
        %952 = vmatprep.subr.mxu0 %v790
        %953 = vmatpush1.msra.mxu0 %v789
        %954 = vmatprep.subr.mxu0 0.0
        %955 = vmatpush2.msra.mxu0 0.0
        %956 = vmatprep.subr.mxu0 0.0
        %957 = vmatpush2.msra.mxu0 0.0
        %958 = vmatprep.subr.mxu0 0.0
        %959 = vmatpush2.msra.mxu0 0.0
        %960 = vmatprep.subr.mxu0 0.0
        %961 = vmatpush2.msra.mxu0 0.0
        %962 = vmatprep.subr.mxu0 0.0
        %963 = vmatpush2.msra.mxu0 0.0
        %964 = vmatprep.subr.mxu0 0.0
        %965 = vmatpush2.msra.mxu0 0.0
        %966 = vmatprep.subr.mxu0 0.0
        %967 = vmatpush2.msra.mxu0 0.0
        %968 = vmatprep.subr.mxu0 0.0
        %969 = vmatpush2.msra.mxu0 0.0
        %970 = vmatprep.subr.mxu0 0.0
        %971 = vmatpush2.msra.mxu0 0.0
        %972 = vmatprep.subr.mxu0 0.0
        %973 = vmatpush2.msra.mxu0 0.0
        %974 = vmatprep.subr.mxu0 0.0
        %975 = vmatpush2.msra.mxu0 0.0
        %976 = vmatprep.subr.mxu0 0.0
        %977 = vmatpush2.msra.mxu0 0.0
        %978 = vmatprep.subr.mxu0 0.0
        %979 = vmatpush2.msra.mxu0 0.0
        %980 = vmatprep.subr.mxu0 0.0
        %981 = vmatpush2.msra.mxu0 0.0
        %982 = vmatprep.subr.mxu0 0.0
        %983 = vmatpush2.msra.mxu0 0.0
        %984 = vmatprep.subr.mxu0 0.0
        %985 = vmatpush2.msra.mxu0 0.0
        %986 = vmatprep.mubr.f32.mxu0 0.0
        %987 = vmatmul.mubr.f32.gmra.mxu0 %v779
        %v988 = vpop.f32.mrf.mxu0
        %v989 = vadd.f32 0.0, %v988
        %v990 = vpop.f32.mrf.mxu0
        %v991 = vadd.f32 0.0, %v990
        %992 = vdwg.mxu0
        %v993 = vadd.f32 %v783, %v918
        %v994 = vadd.f32 %v784, %v920
        %v995 = vadd.f32 %v785, %v989
        %v996 = vadd.f32 %v786, %v991
        %v997 = vxor.u32 %v993, 2147483648
        %v998 = vmul.f32 %v997, 1.442695
        %v999 = vpow.pop %v998
        %v1000 = vadd.f32 %v999, 1.0
        %v1001 = vrcp.pop %v1000
        %v1002 = vmul.f32 1.0, %v1001
        %v1003 = vxor.u32 %v994, 2147483648
        %v1004 = vmul.f32 %v1003, 1.442695
        %v1005 = vpow.pop %v1004
        %v1006 = vadd.f32 %v1005, 1.0
        %v1007 = vrcp.pop %v1006
        %v1008 = vmul.f32 1.0, %v1007
        %v1009 = vtanh.pop %v995
        %v1010 = vxor.u32 %v996, 2147483648
        %v1011 = vmul.f32 %v1010, 1.442695
        %v1012 = vpow.pop %v1011
        %v1013 = vadd.f32 %v1012, 1.0
        %v1014 = vrcp.pop %v1013
        %v1015 = vmul.f32 1.0, %v1014
        %v1016 = vmul.f32 %v1002, %v1009
        %v1017 = vmul.f32 %v1008, %v778
        %v1018 = vadd.f32 %v1016, %v1017
        %v1019 = vmax.f32 %v1018, -3.0
        %v1020 = vmin.f32 %v1019, 3.0
        %v1021 = vtanh.pop %v1020
        %v1022 = vmul.f32 %v1015, %v1021
        %v1023 = vld [vmem:[#allocation7] sm:$0xff]
        %v1024 = vld [vmem:[#allocation7 + $0x8] sm:$0xff]
        %v1025 = vld [vmem:[#allocation7 + $0x10] sm:$0xff]
        %v1026 = vld [vmem:[#allocation7 + $0x18] sm:$0xff]
        %v1027 = vld [vmem:[#allocation7 + $0x20] sm:$0xff]
        %v1028 = vld [vmem:[#allocation7 + $0x28] sm:$0xff]
        %v1029 = vld [vmem:[#allocation7 + $0x30] sm:$0xff]
        %v1030 = vld [vmem:[#allocation7 + $0x38] sm:$0xff]
        %v1031 = vld [vmem:[#allocation7 + $0x40] sm:$0xff]
        %v1032 = vld [vmem:[#allocation7 + $0x48] sm:$0xff]
        %v1033 = vld [vmem:[#allocation7 + $0x50] sm:$0xff]
        %v1034 = vld [vmem:[#allocation7 + $0x58] sm:$0xff]
        %v1035 = vld [vmem:[#allocation7 + $0x60] sm:$0xff]
        %v1036 = vld [vmem:[#allocation7 + $0x68] sm:$0xff]
        %v1037 = vld [vmem:[#allocation7 + $0x70] sm:$0xff]
        %v1038 = vld [vmem:[#allocation7 + $0x78] sm:$0xff]
        %1039 = vmatprep.subr.mxu0 0.0
        %1040 = vmatpush1.msra.mxu0 %v1038
        %1041 = vmatprep.subr.mxu0 0.0
        %1042 = vmatpush1.msra.mxu0 %v1037
        %1043 = vmatprep.subr.mxu0 0.0
        %1044 = vmatpush1.msra.mxu0 %v1036
        %1045 = vmatprep.subr.mxu0 0.0
        %1046 = vmatpush1.msra.mxu0 %v1035
        %1047 = vmatprep.subr.mxu0 0.0
        %1048 = vmatpush1.msra.mxu0 %v1034
        %1049 = vmatprep.subr.mxu0 0.0
        %1050 = vmatpush1.msra.mxu0 %v1033
        %1051 = vmatprep.subr.mxu0 0.0
        %1052 = vmatpush1.msra.mxu0 %v1032
        %1053 = vmatprep.subr.mxu0 0.0
        %1054 = vmatpush1.msra.mxu0 %v1031
        %1055 = vmatprep.subr.mxu0 0.0
        %1056 = vmatpush1.msra.mxu0 %v1030
        %1057 = vmatprep.subr.mxu0 0.0
        %1058 = vmatpush1.msra.mxu0 %v1029
        %1059 = vmatprep.subr.mxu0 0.0
        %1060 = vmatpush1.msra.mxu0 %v1028
        %1061 = vmatprep.subr.mxu0 0.0
        %1062 = vmatpush1.msra.mxu0 %v1027
        %1063 = vmatprep.subr.mxu0 0.0
        %1064 = vmatpush1.msra.mxu0 %v1026
        %1065 = vmatprep.subr.mxu0 0.0
        %1066 = vmatpush1.msra.mxu0 %v1025
        %1067 = vmatprep.subr.mxu0 0.0
        %1068 = vmatpush1.msra.mxu0 %v1024
        %1069 = vmatprep.subr.mxu0 0.0
        %1070 = vmatpush1.msra.mxu0 %v1023
        %1071 = vmatprep.subr.mxu0 0.0
        %1072 = vmatpush2.msra.mxu0 0.0
        %1073 = vmatprep.subr.mxu0 0.0
        %1074 = vmatpush2.msra.mxu0 0.0
        %1075 = vmatprep.subr.mxu0 0.0
        %1076 = vmatpush2.msra.mxu0 0.0
        %1077 = vmatprep.subr.mxu0 0.0
        %1078 = vmatpush2.msra.mxu0 0.0
        %1079 = vmatprep.subr.mxu0 0.0
        %1080 = vmatpush2.msra.mxu0 0.0
        %1081 = vmatprep.subr.mxu0 0.0
        %1082 = vmatpush2.msra.mxu0 0.0
        %1083 = vmatprep.subr.mxu0 0.0
        %1084 = vmatpush2.msra.mxu0 0.0
        %1085 = vmatprep.subr.mxu0 0.0
        %1086 = vmatpush2.msra.mxu0 0.0
        %1087 = vmatprep.subr.mxu0 0.0
        %1088 = vmatpush2.msra.mxu0 0.0
        %1089 = vmatprep.subr.mxu0 0.0
        %1090 = vmatpush2.msra.mxu0 0.0
        %1091 = vmatprep.subr.mxu0 0.0
        %1092 = vmatpush2.msra.mxu0 0.0
        %1093 = vmatprep.subr.mxu0 0.0
        %1094 = vmatpush2.msra.mxu0 0.0
        %1095 = vmatprep.subr.mxu0 0.0
        %1096 = vmatpush2.msra.mxu0 0.0
        %1097 = vmatprep.subr.mxu0 0.0
        %1098 = vmatpush2.msra.mxu0 0.0
        %1099 = vmatprep.subr.mxu0 0.0
        %1100 = vmatpush2.msra.mxu0 0.0
        %1101 = vmatprep.subr.mxu0 0.0
        %1102 = vmatpush2.msra.mxu0 0.0
        %1103 = vmatprep.mubr.f32.mxu0 0.0
        %1104 = vmatmul.mubr.f32.gmra.mxu0 %v1022
        %v1105 = vpop.f32.mrf.mxu0
        %v1106 = vadd.f32 0.0, %v1105
        %v1107 = vpop.f32.mrf.mxu0
        %1108 = vdwg.mxu0
        %v1109 = vmax.f32 %v1106, -3.0
        %v1110 = vmin.f32 %v1109, 3.0
        %s1111 = sadd.s32 %s440, 1
        %v1112 = vstv %s1111
        %vm1113 = vcmp.lt.s32.totalorder %v1112, %v439
        %v1114 = vsel %vm1113, 1, 0
        %1115 = vset.pattern.permute.xlu0 0
        %1116 = vperm.xlu0 %1115, %v1114
        %v1117 = vpop.permute.xlu0 %1116
        %vm1118 = vcmp.eq.s32.totalorder %v1117, 1
        %v1119 = vsel %vm1118, %v1020, %v778
        %v1120 = vsel %vm1118, %v1110, %v779
        %v1121 = vsel %vm1118, %v1110, 0.0
        %s1122 = scalar_lea.vmem %s412, 8 [#allocation8]
        %1123 = vst [vmem:[%s1122] sm:$0xff] %v1121
        %s1124 = scalar_lea.vmem %s364, 64 [#allocation2]
        %v1125 = vld [vmem:[%s1124] sm:$0xff]
        %v1126 = vld [vmem:[%s1124 + $0x8] sm:$0xff]
        %v1127 = vld [vmem:[%s1124 + $0x10] sm:$0xff]
        %v1128 = vld [vmem:[%s1124 + $0x18] sm:$0xff]
        %v1129 = vld [vmem:[#allocation5] sm:$0xff]
        %v1130 = vld [vmem:[#allocation5 + $0x8] sm:$0xff]
        %v1131 = vld [vmem:[#allocation5 + $0x10] sm:$0xff]
        %v1132 = vld [vmem:[#allocation5 + $0x18] sm:$0xff]
        %v1133 = vld [vmem:[#allocation5 + $0x20] sm:$0xff]
        %v1134 = vld [vmem:[#allocation5 + $0x28] sm:$0xff]
        %v1135 = vld [vmem:[#allocation5 + $0x30] sm:$0xff]
        %v1136 = vld [vmem:[#allocation5 + $0x38] sm:$0xff]
        %v1137 = vld [vmem:[#allocation5 + $0x40] sm:$0xff]
        %v1138 = vld [vmem:[#allocation5 + $0x48] sm:$0xff]
        %v1139 = vld [vmem:[#allocation5 + $0x50] sm:$0xff]
        %v1140 = vld [vmem:[#allocation5 + $0x58] sm:$0xff]
        %v1141 = vld [vmem:[#allocation5 + $0x60] sm:$0xff]
        %v1142 = vld [vmem:[#allocation5 + $0x68] sm:$0xff]
        %v1143 = vld [vmem:[#allocation5 + $0x70] sm:$0xff]
        %v1144 = vld [vmem:[#allocation5 + $0x78] sm:$0xff]
        %v1145 = vld [vmem:[#allocation5 + $0x80] sm:$0xff]
        %v1146 = vld [vmem:[#allocation5 + $0x88] sm:$0xff]
        %v1147 = vld [vmem:[#allocation5 + $0x90] sm:$0xff]
        %v1148 = vld [vmem:[#allocation5 + $0x98] sm:$0xff]
        %v1149 = vld [vmem:[#allocation5 + $0xa0] sm:$0xff]
        %v1150 = vld [vmem:[#allocation5 + $0xa8] sm:$0xff]
        %v1151 = vld [vmem:[#allocation5 + $0xb0] sm:$0xff]
        %v1152 = vld [vmem:[#allocation5 + $0xb8] sm:$0xff]
        %v1153 = vld [vmem:[#allocation5 + $0xc0] sm:$0xff]
        %v1154 = vld [vmem:[#allocation5 + $0xc8] sm:$0xff]
        %v1155 = vld [vmem:[#allocation5 + $0xd0] sm:$0xff]
        %v1156 = vld [vmem:[#allocation5 + $0xd8] sm:$0xff]
        %v1157 = vld [vmem:[#allocation5 + $0xe0] sm:$0xff]
        %v1158 = vld [vmem:[#allocation5 + $0xe8] sm:$0xff]
        %v1159 = vld [vmem:[#allocation5 + $0xf0] sm:$0xff]
        %v1160 = vld [vmem:[#allocation5 + $0xf8] sm:$0xff]
        %v1161 = vld [vmem:[#allocation5 + $0x100] sm:$0xff]
        %v1162 = vld [vmem:[#allocation5 + $0x108] sm:$0xff]
        %v1163 = vld [vmem:[#allocation5 + $0x110] sm:$0xff]
        %v1164 = vld [vmem:[#allocation5 + $0x118] sm:$0xff]
        %v1165 = vld [vmem:[#allocation5 + $0x120] sm:$0xff]
        %v1166 = vld [vmem:[#allocation5 + $0x128] sm:$0xff]
        %v1167 = vld [vmem:[#allocation5 + $0x130] sm:$0xff]
        %v1168 = vld [vmem:[#allocation5 + $0x138] sm:$0xff]
        %v1169 = vld [vmem:[#allocation5 + $0x140] sm:$0xff]
        %v1170 = vld [vmem:[#allocation5 + $0x148] sm:$0xff]
        %v1171 = vld [vmem:[#allocation5 + $0x150] sm:$0xff]
        %v1172 = vld [vmem:[#allocation5 + $0x158] sm:$0xff]
        %v1173 = vld [vmem:[#allocation5 + $0x160] sm:$0xff]
        %v1174 = vld [vmem:[#allocation5 + $0x168] sm:$0xff]
        %v1175 = vld [vmem:[#allocation5 + $0x170] sm:$0xff]
        %v1176 = vld [vmem:[#allocation5 + $0x178] sm:$0xff]
        %v1177 = vld [vmem:[#allocation5 + $0x180] sm:$0xff]
        %v1178 = vld [vmem:[#allocation5 + $0x188] sm:$0xff]
        %v1179 = vld [vmem:[#allocation5 + $0x190] sm:$0xff]
        %v1180 = vld [vmem:[#allocation5 + $0x198] sm:$0xff]
        %v1181 = vld [vmem:[#allocation5 + $0x1a0] sm:$0xff]
        %v1182 = vld [vmem:[#allocation5 + $0x1a8] sm:$0xff]
        %v1183 = vld [vmem:[#allocation5 + $0x1b0] sm:$0xff]
        %v1184 = vld [vmem:[#allocation5 + $0x1b8] sm:$0xff]
        %v1185 = vld [vmem:[#allocation5 + $0x1c0] sm:$0xff]
        %v1186 = vld [vmem:[#allocation5 + $0x1c8] sm:$0xff]
        %v1187 = vld [vmem:[#allocation5 + $0x1d0] sm:$0xff]
        %v1188 = vld [vmem:[#allocation5 + $0x1d8] sm:$0xff]
        %v1189 = vld [vmem:[#allocation5 + $0x1e0] sm:$0xff]
        %v1190 = vld [vmem:[#allocation5 + $0x1e8] sm:$0xff]
        %v1191 = vld [vmem:[#allocation5 + $0x1f0] sm:$0xff]
        %v1192 = vld [vmem:[#allocation5 + $0x1f8] sm:$0xff]
        %1193 = vmatprep.subr.mxu0 %v1190
        %1194 = vmatpush1.msra.mxu0 %v1189
        %1195 = vmatprep.subr.mxu0 %v1186
        %1196 = vmatpush1.msra.mxu0 %v1185
        %1197 = vmatprep.subr.mxu0 %v1182
        %1198 = vmatpush1.msra.mxu0 %v1181
        %1199 = vmatprep.subr.mxu0 %v1178
        %1200 = vmatpush1.msra.mxu0 %v1177
        %1201 = vmatprep.subr.mxu0 %v1174
        %1202 = vmatpush1.msra.mxu0 %v1173
        %1203 = vmatprep.subr.mxu0 %v1170
        %1204 = vmatpush1.msra.mxu0 %v1169
        %1205 = vmatprep.subr.mxu0 %v1166
        %1206 = vmatpush1.msra.mxu0 %v1165
        %1207 = vmatprep.subr.mxu0 %v1162
        %1208 = vmatpush1.msra.mxu0 %v1161
        %1209 = vmatprep.subr.mxu0 %v1158
        %1210 = vmatpush1.msra.mxu0 %v1157
        %1211 = vmatprep.subr.mxu0 %v1154
        %1212 = vmatpush1.msra.mxu0 %v1153
        %1213 = vmatprep.subr.mxu0 %v1150
        %1214 = vmatpush1.msra.mxu0 %v1149
        %1215 = vmatprep.subr.mxu0 %v1146
        %1216 = vmatpush1.msra.mxu0 %v1145
        %1217 = vmatprep.subr.mxu0 %v1142
        %1218 = vmatpush1.msra.mxu0 %v1141
        %1219 = vmatprep.subr.mxu0 %v1138
        %1220 = vmatpush1.msra.mxu0 %v1137
        %1221 = vmatprep.subr.mxu0 %v1134
        %1222 = vmatpush1.msra.mxu0 %v1133
        %1223 = vmatprep.subr.mxu0 %v1130
        %1224 = vmatpush1.msra.mxu0 %v1129
        %1225 = vmatprep.subr.mxu0 0.0
        %1226 = vmatpush2.msra.mxu0 0.0
        %1227 = vmatprep.subr.mxu0 0.0
        %1228 = vmatpush2.msra.mxu0 0.0
        %1229 = vmatprep.subr.mxu0 0.0
        %1230 = vmatpush2.msra.mxu0 0.0
        %1231 = vmatprep.subr.mxu0 0.0
        %1232 = vmatpush2.msra.mxu0 0.0
        %1233 = vmatprep.subr.mxu0 0.0
        %1234 = vmatpush2.msra.mxu0 0.0
        %1235 = vmatprep.subr.mxu0 0.0
        %1236 = vmatpush2.msra.mxu0 0.0
        %1237 = vmatprep.subr.mxu0 0.0
        %1238 = vmatpush2.msra.mxu0 0.0
        %1239 = vmatprep.subr.mxu0 0.0
        %1240 = vmatpush2.msra.mxu0 0.0
        %1241 = vmatprep.subr.mxu0 0.0
        %1242 = vmatpush2.msra.mxu0 0.0
        %1243 = vmatprep.subr.mxu0 0.0
        %1244 = vmatpush2.msra.mxu0 0.0
        %1245 = vmatprep.subr.mxu0 0.0
        %1246 = vmatpush2.msra.mxu0 0.0
        %1247 = vmatprep.subr.mxu0 0.0
        %1248 = vmatpush2.msra.mxu0 0.0
        %1249 = vmatprep.subr.mxu0 0.0
        %1250 = vmatpush2.msra.mxu0 0.0
        %1251 = vmatprep.subr.mxu0 0.0
        %1252 = vmatpush2.msra.mxu0 0.0
        %1253 = vmatprep.subr.mxu0 0.0
        %1254 = vmatpush2.msra.mxu0 0.0
        %1255 = vmatprep.subr.mxu0 0.0
        %1256 = vmatpush2.msra.mxu0 0.0
        %1257 = vmatprep.mubr.f32.mxu0 0.0
        %1258 = vmatmul.mubr.f32.gmra.mxu0 %v1120
        %v1259 = vpop.f32.mrf.mxu0
        %v1260 = vadd.f32 0.0, %v1259
        %v1261 = vpop.f32.mrf.mxu0
        %v1262 = vadd.f32 0.0, %v1261
        %1263 = vdwg.mxu0
        %1264 = vmatprep.subr.mxu0 %v1192
        %1265 = vmatpush1.msra.mxu0 %v1191
        %1266 = vmatprep.subr.mxu0 %v1188
        %1267 = vmatpush1.msra.mxu0 %v1187
        %1268 = vmatprep.subr.mxu0 %v1184
        %1269 = vmatpush1.msra.mxu0 %v1183
        %1270 = vmatprep.subr.mxu0 %v1180
        %1271 = vmatpush1.msra.mxu0 %v1179
        %1272 = vmatprep.subr.mxu0 %v1176
        %1273 = vmatpush1.msra.mxu0 %v1175
        %1274 = vmatprep.subr.mxu0 %v1172
        %1275 = vmatpush1.msra.mxu0 %v1171
        %1276 = vmatprep.subr.mxu0 %v1168
        %1277 = vmatpush1.msra.mxu0 %v1167
        %1278 = vmatprep.subr.mxu0 %v1164
        %1279 = vmatpush1.msra.mxu0 %v1163
        %1280 = vmatprep.subr.mxu0 %v1160
        %1281 = vmatpush1.msra.mxu0 %v1159
        %1282 = vmatprep.subr.mxu0 %v1156
        %1283 = vmatpush1.msra.mxu0 %v1155
        %1284 = vmatprep.subr.mxu0 %v1152
        %1285 = vmatpush1.msra.mxu0 %v1151
        %1286 = vmatprep.subr.mxu0 %v1148
        %1287 = vmatpush1.msra.mxu0 %v1147
        %1288 = vmatprep.subr.mxu0 %v1144
        %1289 = vmatpush1.msra.mxu0 %v1143
        %1290 = vmatprep.subr.mxu0 %v1140
        %1291 = vmatpush1.msra.mxu0 %v1139
        %1292 = vmatprep.subr.mxu0 %v1136
        %1293 = vmatpush1.msra.mxu0 %v1135
        %1294 = vmatprep.subr.mxu0 %v1132
        %1295 = vmatpush1.msra.mxu0 %v1131
        %1296 = vmatprep.subr.mxu0 0.0
        %1297 = vmatpush2.msra.mxu0 0.0
        %1298 = vmatprep.subr.mxu0 0.0
        %1299 = vmatpush2.msra.mxu0 0.0
        %1300 = vmatprep.subr.mxu0 0.0
        %1301 = vmatpush2.msra.mxu0 0.0
        %1302 = vmatprep.subr.mxu0 0.0
        %1303 = vmatpush2.msra.mxu0 0.0
        %1304 = vmatprep.subr.mxu0 0.0
        %1305 = vmatpush2.msra.mxu0 0.0
        %1306 = vmatprep.subr.mxu0 0.0
        %1307 = vmatpush2.msra.mxu0 0.0
        %1308 = vmatprep.subr.mxu0 0.0
        %1309 = vmatpush2.msra.mxu0 0.0
        %1310 = vmatprep.subr.mxu0 0.0
        %1311 = vmatpush2.msra.mxu0 0.0
        %1312 = vmatprep.subr.mxu0 0.0
        %1313 = vmatpush2.msra.mxu0 0.0
        %1314 = vmatprep.subr.mxu0 0.0
        %1315 = vmatpush2.msra.mxu0 0.0
        %1316 = vmatprep.subr.mxu0 0.0
        %1317 = vmatpush2.msra.mxu0 0.0
        %1318 = vmatprep.subr.mxu0 0.0
        %1319 = vmatpush2.msra.mxu0 0.0
        %1320 = vmatprep.subr.mxu0 0.0
        %1321 = vmatpush2.msra.mxu0 0.0
        %1322 = vmatprep.subr.mxu0 0.0
        %1323 = vmatpush2.msra.mxu0 0.0
        %1324 = vmatprep.subr.mxu0 0.0
        %1325 = vmatpush2.msra.mxu0 0.0
        %1326 = vmatprep.subr.mxu0 0.0
        %1327 = vmatpush2.msra.mxu0 0.0
        %1328 = vmatprep.mubr.f32.mxu0 0.0
        %1329 = vmatmul.mubr.f32.gmra.mxu0 %v1120
        %v1330 = vpop.f32.mrf.mxu0
        %v1331 = vadd.f32 0.0, %v1330
        %v1332 = vpop.f32.mrf.mxu0
        %v1333 = vadd.f32 0.0, %v1332
        %1334 = vdwg.mxu0
        %v1335 = vadd.f32 %v1125, %v1260
        %v1336 = vadd.f32 %v1126, %v1262
        %v1337 = vadd.f32 %v1127, %v1331
        %v1338 = vadd.f32 %v1128, %v1333
        %v1339 = vxor.u32 %v1335, 2147483648
        %v1340 = vmul.f32 %v1339, 1.442695
        %v1341 = vpow.pop %v1340
        %v1342 = vadd.f32 %v1341, 1.0
        %v1343 = vrcp.pop %v1342
        %v1344 = vmul.f32 1.0, %v1343
        %v1345 = vxor.u32 %v1336, 2147483648
        %v1346 = vmul.f32 %v1345, 1.442695
        %v1347 = vpow.pop %v1346
        %v1348 = vadd.f32 %v1347, 1.0
        %v1349 = vrcp.pop %v1348
        %v1350 = vmul.f32 1.0, %v1349
        %v1351 = vtanh.pop %v1337
        %v1352 = vxor.u32 %v1338, 2147483648
        %v1353 = vmul.f32 %v1352, 1.442695
        %v1354 = vpow.pop %v1353
        %v1355 = vadd.f32 %v1354, 1.0
        %v1356 = vrcp.pop %v1355
        %v1357 = vmul.f32 1.0, %v1356
        %v1358 = vmul.f32 %v1344, %v1351
        %v1359 = vmul.f32 %v1350, %v1119
        %v1360 = vadd.f32 %v1358, %v1359
        %v1361 = vmax.f32 %v1360, -3.0
        %v1362 = vmin.f32 %v1361, 3.0
        %v1363 = vtanh.pop %v1362
        %v1364 = vmul.f32 %v1357, %v1363
        %v1365 = vld [vmem:[#allocation7] sm:$0xff]
        %v1366 = vld [vmem:[#allocation7 + $0x8] sm:$0xff]
        %v1367 = vld [vmem:[#allocation7 + $0x10] sm:$0xff]
        %v1368 = vld [vmem:[#allocation7 + $0x18] sm:$0xff]
        %v1369 = vld [vmem:[#allocation7 + $0x20] sm:$0xff]
        %v1370 = vld [vmem:[#allocation7 + $0x28] sm:$0xff]
        %v1371 = vld [vmem:[#allocation7 + $0x30] sm:$0xff]
        %v1372 = vld [vmem:[#allocation7 + $0x38] sm:$0xff]
        %v1373 = vld [vmem:[#allocation7 + $0x40] sm:$0xff]
        %v1374 = vld [vmem:[#allocation7 + $0x48] sm:$0xff]
        %v1375 = vld [vmem:[#allocation7 + $0x50] sm:$0xff]
        %v1376 = vld [vmem:[#allocation7 + $0x58] sm:$0xff]
        %v1377 = vld [vmem:[#allocation7 + $0x60] sm:$0xff]
        %v1378 = vld [vmem:[#allocation7 + $0x68] sm:$0xff]
        %v1379 = vld [vmem:[#allocation7 + $0x70] sm:$0xff]
        %v1380 = vld [vmem:[#allocation7 + $0x78] sm:$0xff]
        %1381 = vmatprep.subr.mxu0 0.0
        %1382 = vmatpush1.msra.mxu0 %v1380
        %1383 = vmatprep.subr.mxu0 0.0
        %1384 = vmatpush1.msra.mxu0 %v1379
        %1385 = vmatprep.subr.mxu0 0.0
        %1386 = vmatpush1.msra.mxu0 %v1378
        %1387 = vmatprep.subr.mxu0 0.0
        %1388 = vmatpush1.msra.mxu0 %v1377
        %1389 = vmatprep.subr.mxu0 0.0
        %1390 = vmatpush1.msra.mxu0 %v1376
        %1391 = vmatprep.subr.mxu0 0.0
        %1392 = vmatpush1.msra.mxu0 %v1375
        %1393 = vmatprep.subr.mxu0 0.0
        %1394 = vmatpush1.msra.mxu0 %v1374
        %1395 = vmatprep.subr.mxu0 0.0
        %1396 = vmatpush1.msra.mxu0 %v1373
        %1397 = vmatprep.subr.mxu0 0.0
        %1398 = vmatpush1.msra.mxu0 %v1372
        %1399 = vmatprep.subr.mxu0 0.0
        %1400 = vmatpush1.msra.mxu0 %v1371
        %1401 = vmatprep.subr.mxu0 0.0
        %1402 = vmatpush1.msra.mxu0 %v1370
        %1403 = vmatprep.subr.mxu0 0.0
        %1404 = vmatpush1.msra.mxu0 %v1369
        %1405 = vmatprep.subr.mxu0 0.0
        %1406 = vmatpush1.msra.mxu0 %v1368
        %1407 = vmatprep.subr.mxu0 0.0
        %1408 = vmatpush1.msra.mxu0 %v1367
        %1409 = vmatprep.subr.mxu0 0.0
        %1410 = vmatpush1.msra.mxu0 %v1366
        %1411 = vmatprep.subr.mxu0 0.0
        %1412 = vmatpush1.msra.mxu0 %v1365
        %1413 = vmatprep.subr.mxu0 0.0
        %1414 = vmatpush2.msra.mxu0 0.0
        %1415 = vmatprep.subr.mxu0 0.0
        %1416 = vmatpush2.msra.mxu0 0.0
        %1417 = vmatprep.subr.mxu0 0.0
        %1418 = vmatpush2.msra.mxu0 0.0
        %1419 = vmatprep.subr.mxu0 0.0
        %1420 = vmatpush2.msra.mxu0 0.0
        %1421 = vmatprep.subr.mxu0 0.0
        %1422 = vmatpush2.msra.mxu0 0.0
        %1423 = vmatprep.subr.mxu0 0.0
        %1424 = vmatpush2.msra.mxu0 0.0
        %1425 = vmatprep.subr.mxu0 0.0
        %1426 = vmatpush2.msra.mxu0 0.0
        %1427 = vmatprep.subr.mxu0 0.0
        %1428 = vmatpush2.msra.mxu0 0.0
        %1429 = vmatprep.subr.mxu0 0.0
        %1430 = vmatpush2.msra.mxu0 0.0
        %1431 = vmatprep.subr.mxu0 0.0
        %1432 = vmatpush2.msra.mxu0 0.0
        %1433 = vmatprep.subr.mxu0 0.0
        %1434 = vmatpush2.msra.mxu0 0.0
        %1435 = vmatprep.subr.mxu0 0.0
        %1436 = vmatpush2.msra.mxu0 0.0
        %1437 = vmatprep.subr.mxu0 0.0
        %1438 = vmatpush2.msra.mxu0 0.0
        %1439 = vmatprep.subr.mxu0 0.0
        %1440 = vmatpush2.msra.mxu0 0.0
        %1441 = vmatprep.subr.mxu0 0.0
        %1442 = vmatpush2.msra.mxu0 0.0
        %1443 = vmatprep.subr.mxu0 0.0
        %1444 = vmatpush2.msra.mxu0 0.0
        %1445 = vmatprep.mubr.f32.mxu0 0.0
        %1446 = vmatmul.mubr.f32.gmra.mxu0 %v1364
        %v1447 = vpop.f32.mrf.mxu0
        %v1448 = vadd.f32 0.0, %v1447
        %v1449 = vpop.f32.mrf.mxu0
        %1450 = vdwg.mxu0
        %v1451 = vmax.f32 %v1448, -3.0
        %v1452 = vmin.f32 %v1451, 3.0
        %s1453 = sadd.s32 %s440, 2
        %v1454 = vstv %s1453
        %vm1455 = vcmp.lt.s32.totalorder %v1454, %v439
        %v1456 = vsel %vm1455, 1, 0
        %1457 = vset.pattern.permute.xlu0 0
        %1458 = vperm.xlu0 %1457, %v1456
        %v1459 = vpop.permute.xlu0 %1458
        %vm1460 = vcmp.eq.s32.totalorder %v1459, 1
        %v1461 = vsel %vm1460, %v1362, %v1119
        %v1462 = vsel %vm1460, %v1452, %v1120
        %v1463 = vsel %vm1460, %v1452, 0.0
        %s1464 = scalar_lea.vmem %s412, 16 [#allocation8]
        %1465 = vst [vmem:[%s1464] sm:$0xff] %v1463
        %s1466 = scalar_lea.vmem %s364, 96 [#allocation2]
        %v1467 = vld [vmem:[%s1466] sm:$0xff]
        %v1468 = vld [vmem:[%s1466 + $0x8] sm:$0xff]
        %v1469 = vld [vmem:[%s1466 + $0x10] sm:$0xff]
        %v1470 = vld [vmem:[%s1466 + $0x18] sm:$0xff]
        %v1471 = vld [vmem:[#allocation5] sm:$0xff]
        %v1472 = vld [vmem:[#allocation5 + $0x8] sm:$0xff]
        %v1473 = vld [vmem:[#allocation5 + $0x10] sm:$0xff]
        %v1474 = vld [vmem:[#allocation5 + $0x18] sm:$0xff]
        %v1475 = vld [vmem:[#allocation5 + $0x20] sm:$0xff]
        %v1476 = vld [vmem:[#allocation5 + $0x28] sm:$0xff]
        %v1477 = vld [vmem:[#allocation5 + $0x30] sm:$0xff]
        %v1478 = vld [vmem:[#allocation5 + $0x38] sm:$0xff]
        %v1479 = vld [vmem:[#allocation5 + $0x40] sm:$0xff]
        %v1480 = vld [vmem:[#allocation5 + $0x48] sm:$0xff]
        %v1481 = vld [vmem:[#allocation5 + $0x50] sm:$0xff]
        %v1482 = vld [vmem:[#allocation5 + $0x58] sm:$0xff]
        %v1483 = vld [vmem:[#allocation5 + $0x60] sm:$0xff]
        %v1484 = vld [vmem:[#allocation5 + $0x68] sm:$0xff]
        %v1485 = vld [vmem:[#allocation5 + $0x70] sm:$0xff]
        %v1486 = vld [vmem:[#allocation5 + $0x78] sm:$0xff]
        %v1487 = vld [vmem:[#allocation5 + $0x80] sm:$0xff]
        %v1488 = vld [vmem:[#allocation5 + $0x88] sm:$0xff]
        %v1489 = vld [vmem:[#allocation5 + $0x90] sm:$0xff]
        %v1490 = vld [vmem:[#allocation5 + $0x98] sm:$0xff]
        %v1491 = vld [vmem:[#allocation5 + $0xa0] sm:$0xff]
        %v1492 = vld [vmem:[#allocation5 + $0xa8] sm:$0xff]
        %v1493 = vld [vmem:[#allocation5 + $0xb0] sm:$0xff]
        %v1494 = vld [vmem:[#allocation5 + $0xb8] sm:$0xff]
        %v1495 = vld [vmem:[#allocation5 + $0xc0] sm:$0xff]
        %v1496 = vld [vmem:[#allocation5 + $0xc8] sm:$0xff]
        %v1497 = vld [vmem:[#allocation5 + $0xd0] sm:$0xff]
        %v1498 = vld [vmem:[#allocation5 + $0xd8] sm:$0xff]
        %v1499 = vld [vmem:[#allocation5 + $0xe0] sm:$0xff]
        %v1500 = vld [vmem:[#allocation5 + $0xe8] sm:$0xff]
        %v1501 = vld [vmem:[#allocation5 + $0xf0] sm:$0xff]
        %v1502 = vld [vmem:[#allocation5 + $0xf8] sm:$0xff]
        %v1503 = vld [vmem:[#allocation5 + $0x100] sm:$0xff]
        %v1504 = vld [vmem:[#allocation5 + $0x108] sm:$0xff]
        %v1505 = vld [vmem:[#allocation5 + $0x110] sm:$0xff]
        %v1506 = vld [vmem:[#allocation5 + $0x118] sm:$0xff]
        %v1507 = vld [vmem:[#allocation5 + $0x120] sm:$0xff]
        %v1508 = vld [vmem:[#allocation5 + $0x128] sm:$0xff]
        %v1509 = vld [vmem:[#allocation5 + $0x130] sm:$0xff]
        %v1510 = vld [vmem:[#allocation5 + $0x138] sm:$0xff]
        %v1511 = vld [vmem:[#allocation5 + $0x140] sm:$0xff]
        %v1512 = vld [vmem:[#allocation5 + $0x148] sm:$0xff]
        %v1513 = vld [vmem:[#allocation5 + $0x150] sm:$0xff]
        %v1514 = vld [vmem:[#allocation5 + $0x158] sm:$0xff]
        %v1515 = vld [vmem:[#allocation5 + $0x160] sm:$0xff]
        %v1516 = vld [vmem:[#allocation5 + $0x168] sm:$0xff]
        %v1517 = vld [vmem:[#allocation5 + $0x170] sm:$0xff]
        %v1518 = vld [vmem:[#allocation5 + $0x178] sm:$0xff]
        %v1519 = vld [vmem:[#allocation5 + $0x180] sm:$0xff]
        %v1520 = vld [vmem:[#allocation5 + $0x188] sm:$0xff]
        %v1521 = vld [vmem:[#allocation5 + $0x190] sm:$0xff]
        %v1522 = vld [vmem:[#allocation5 + $0x198] sm:$0xff]
        %v1523 = vld [vmem:[#allocation5 + $0x1a0] sm:$0xff]
        %v1524 = vld [vmem:[#allocation5 + $0x1a8] sm:$0xff]
        %v1525 = vld [vmem:[#allocation5 + $0x1b0] sm:$0xff]
        %v1526 = vld [vmem:[#allocation5 + $0x1b8] sm:$0xff]
        %v1527 = vld [vmem:[#allocation5 + $0x1c0] sm:$0xff]
        %v1528 = vld [vmem:[#allocation5 + $0x1c8] sm:$0xff]
        %v1529 = vld [vmem:[#allocation5 + $0x1d0] sm:$0xff]
        %v1530 = vld [vmem:[#allocation5 + $0x1d8] sm:$0xff]
        %v1531 = vld [vmem:[#allocation5 + $0x1e0] sm:$0xff]
        %v1532 = vld [vmem:[#allocation5 + $0x1e8] sm:$0xff]
        %v1533 = vld [vmem:[#allocation5 + $0x1f0] sm:$0xff]
        %v1534 = vld [vmem:[#allocation5 + $0x1f8] sm:$0xff]
        %1535 = vmatprep.subr.mxu0 %v1532
        %1536 = vmatpush1.msra.mxu0 %v1531
        %1537 = vmatprep.subr.mxu0 %v1528
        %1538 = vmatpush1.msra.mxu0 %v1527
        %1539 = vmatprep.subr.mxu0 %v1524
        %1540 = vmatpush1.msra.mxu0 %v1523
        %1541 = vmatprep.subr.mxu0 %v1520
        %1542 = vmatpush1.msra.mxu0 %v1519
        %1543 = vmatprep.subr.mxu0 %v1516
        %1544 = vmatpush1.msra.mxu0 %v1515
        %1545 = vmatprep.subr.mxu0 %v1512
        %1546 = vmatpush1.msra.mxu0 %v1511
        %1547 = vmatprep.subr.mxu0 %v1508
        %1548 = vmatpush1.msra.mxu0 %v1507
        %1549 = vmatprep.subr.mxu0 %v1504
        %1550 = vmatpush1.msra.mxu0 %v1503
        %1551 = vmatprep.subr.mxu0 %v1500
        %1552 = vmatpush1.msra.mxu0 %v1499
        %1553 = vmatprep.subr.mxu0 %v1496
        %1554 = vmatpush1.msra.mxu0 %v1495
        %1555 = vmatprep.subr.mxu0 %v1492
        %1556 = vmatpush1.msra.mxu0 %v1491
        %1557 = vmatprep.subr.mxu0 %v1488
        %1558 = vmatpush1.msra.mxu0 %v1487
        %1559 = vmatprep.subr.mxu0 %v1484
        %1560 = vmatpush1.msra.mxu0 %v1483
        %1561 = vmatprep.subr.mxu0 %v1480
        %1562 = vmatpush1.msra.mxu0 %v1479
        %1563 = vmatprep.subr.mxu0 %v1476
        %1564 = vmatpush1.msra.mxu0 %v1475
        %1565 = vmatprep.subr.mxu0 %v1472
        %1566 = vmatpush1.msra.mxu0 %v1471
        %1567 = vmatprep.subr.mxu0 0.0
        %1568 = vmatpush2.msra.mxu0 0.0
        %1569 = vmatprep.subr.mxu0 0.0
        %1570 = vmatpush2.msra.mxu0 0.0
        %1571 = vmatprep.subr.mxu0 0.0
        %1572 = vmatpush2.msra.mxu0 0.0
        %1573 = vmatprep.subr.mxu0 0.0
        %1574 = vmatpush2.msra.mxu0 0.0
        %1575 = vmatprep.subr.mxu0 0.0
        %1576 = vmatpush2.msra.mxu0 0.0
        %1577 = vmatprep.subr.mxu0 0.0
        %1578 = vmatpush2.msra.mxu0 0.0
        %1579 = vmatprep.subr.mxu0 0.0
        %1580 = vmatpush2.msra.mxu0 0.0
        %1581 = vmatprep.subr.mxu0 0.0
        %1582 = vmatpush2.msra.mxu0 0.0
        %1583 = vmatprep.subr.mxu0 0.0
        %1584 = vmatpush2.msra.mxu0 0.0
        %1585 = vmatprep.subr.mxu0 0.0
        %1586 = vmatpush2.msra.mxu0 0.0
        %1587 = vmatprep.subr.mxu0 0.0
        %1588 = vmatpush2.msra.mxu0 0.0
        %1589 = vmatprep.subr.mxu0 0.0
        %1590 = vmatpush2.msra.mxu0 0.0
        %1591 = vmatprep.subr.mxu0 0.0
        %1592 = vmatpush2.msra.mxu0 0.0
        %1593 = vmatprep.subr.mxu0 0.0
        %1594 = vmatpush2.msra.mxu0 0.0
        %1595 = vmatprep.subr.mxu0 0.0
        %1596 = vmatpush2.msra.mxu0 0.0
        %1597 = vmatprep.subr.mxu0 0.0
        %1598 = vmatpush2.msra.mxu0 0.0
        %1599 = vmatprep.mubr.f32.mxu0 0.0
        %1600 = vmatmul.mubr.f32.gmra.mxu0 %v1462
        %v1601 = vpop.f32.mrf.mxu0
        %v1602 = vadd.f32 0.0, %v1601
        %v1603 = vpop.f32.mrf.mxu0
        %v1604 = vadd.f32 0.0, %v1603
        %1605 = vdwg.mxu0
        %1606 = vmatprep.subr.mxu0 %v1534
        %1607 = vmatpush1.msra.mxu0 %v1533
        %1608 = vmatprep.subr.mxu0 %v1530
        %1609 = vmatpush1.msra.mxu0 %v1529
        %1610 = vmatprep.subr.mxu0 %v1526
        %1611 = vmatpush1.msra.mxu0 %v1525
        %1612 = vmatprep.subr.mxu0 %v1522
        %1613 = vmatpush1.msra.mxu0 %v1521
        %1614 = vmatprep.subr.mxu0 %v1518
        %1615 = vmatpush1.msra.mxu0 %v1517
        %1616 = vmatprep.subr.mxu0 %v1514
        %1617 = vmatpush1.msra.mxu0 %v1513
        %1618 = vmatprep.subr.mxu0 %v1510
        %1619 = vmatpush1.msra.mxu0 %v1509
        %1620 = vmatprep.subr.mxu0 %v1506
        %1621 = vmatpush1.msra.mxu0 %v1505
        %1622 = vmatprep.subr.mxu0 %v1502
        %1623 = vmatpush1.msra.mxu0 %v1501
        %1624 = vmatprep.subr.mxu0 %v1498
        %1625 = vmatpush1.msra.mxu0 %v1497
        %1626 = vmatprep.subr.mxu0 %v1494
        %1627 = vmatpush1.msra.mxu0 %v1493
        %1628 = vmatprep.subr.mxu0 %v1490
        %1629 = vmatpush1.msra.mxu0 %v1489
        %1630 = vmatprep.subr.mxu0 %v1486
        %1631 = vmatpush1.msra.mxu0 %v1485
        %1632 = vmatprep.subr.mxu0 %v1482
        %1633 = vmatpush1.msra.mxu0 %v1481
        %1634 = vmatprep.subr.mxu0 %v1478
        %1635 = vmatpush1.msra.mxu0 %v1477
        %1636 = vmatprep.subr.mxu0 %v1474
        %1637 = vmatpush1.msra.mxu0 %v1473
        %1638 = vmatprep.subr.mxu0 0.0
        %1639 = vmatpush2.msra.mxu0 0.0
        %1640 = vmatprep.subr.mxu0 0.0
        %1641 = vmatpush2.msra.mxu0 0.0
        %1642 = vmatprep.subr.mxu0 0.0
        %1643 = vmatpush2.msra.mxu0 0.0
        %1644 = vmatprep.subr.mxu0 0.0
        %1645 = vmatpush2.msra.mxu0 0.0
        %1646 = vmatprep.subr.mxu0 0.0
        %1647 = vmatpush2.msra.mxu0 0.0
        %1648 = vmatprep.subr.mxu0 0.0
        %1649 = vmatpush2.msra.mxu0 0.0
        %1650 = vmatprep.subr.mxu0 0.0
        %1651 = vmatpush2.msra.mxu0 0.0
        %1652 = vmatprep.subr.mxu0 0.0
        %1653 = vmatpush2.msra.mxu0 0.0
        %1654 = vmatprep.subr.mxu0 0.0
        %1655 = vmatpush2.msra.mxu0 0.0
        %1656 = vmatprep.subr.mxu0 0.0
        %1657 = vmatpush2.msra.mxu0 0.0
        %1658 = vmatprep.subr.mxu0 0.0
        %1659 = vmatpush2.msra.mxu0 0.0
        %1660 = vmatprep.subr.mxu0 0.0
        %1661 = vmatpush2.msra.mxu0 0.0
        %1662 = vmatprep.subr.mxu0 0.0
        %1663 = vmatpush2.msra.mxu0 0.0
        %1664 = vmatprep.subr.mxu0 0.0
        %1665 = vmatpush2.msra.mxu0 0.0
        %1666 = vmatprep.subr.mxu0 0.0
        %1667 = vmatpush2.msra.mxu0 0.0
        %1668 = vmatprep.subr.mxu0 0.0
        %1669 = vmatpush2.msra.mxu0 0.0
        %1670 = vmatprep.mubr.f32.mxu0 0.0
        %1671 = vmatmul.mubr.f32.gmra.mxu0 %v1462
        %v1672 = vpop.f32.mrf.mxu0
        %v1673 = vadd.f32 0.0, %v1672
        %v1674 = vpop.f32.mrf.mxu0
        %v1675 = vadd.f32 0.0, %v1674
        %1676 = vdwg.mxu0
        %v1677 = vadd.f32 %v1467, %v1602
        %v1678 = vadd.f32 %v1468, %v1604
        %v1679 = vadd.f32 %v1469, %v1673
        %v1680 = vadd.f32 %v1470, %v1675
        %v1681 = vxor.u32 %v1677, 2147483648
        %v1682 = vmul.f32 %v1681, 1.442695
        %v1683 = vpow.pop %v1682
        %v1684 = vadd.f32 %v1683, 1.0
        %v1685 = vrcp.pop %v1684
        %v1686 = vmul.f32 1.0, %v1685
        %v1687 = vxor.u32 %v1678, 2147483648
        %v1688 = vmul.f32 %v1687, 1.442695
        %v1689 = vpow.pop %v1688
        %v1690 = vadd.f32 %v1689, 1.0
        %v1691 = vrcp.pop %v1690
        %v1692 = vmul.f32 1.0, %v1691
        %v1693 = vtanh.pop %v1679
        %v1694 = vxor.u32 %v1680, 2147483648
        %v1695 = vmul.f32 %v1694, 1.442695
        %v1696 = vpow.pop %v1695
        %v1697 = vadd.f32 %v1696, 1.0
        %v1698 = vrcp.pop %v1697
        %v1699 = vmul.f32 1.0, %v1698
        %v1700 = vmul.f32 %v1686, %v1693
        %v1701 = vmul.f32 %v1692, %v1461
        %v1702 = vadd.f32 %v1700, %v1701
        %v1703 = vmax.f32 %v1702, -3.0
        %v1704 = vmin.f32 %v1703, 3.0
        %v1705 = vtanh.pop %v1704
        %v1706 = vmul.f32 %v1699, %v1705
        %v1707 = vld [vmem:[#allocation7] sm:$0xff]
        %v1708 = vld [vmem:[#allocation7 + $0x8] sm:$0xff]
        %v1709 = vld [vmem:[#allocation7 + $0x10] sm:$0xff]
        %v1710 = vld [vmem:[#allocation7 + $0x18] sm:$0xff]
        %v1711 = vld [vmem:[#allocation7 + $0x20] sm:$0xff]
        %v1712 = vld [vmem:[#allocation7 + $0x28] sm:$0xff]
        %v1713 = vld [vmem:[#allocation7 + $0x30] sm:$0xff]
        %v1714 = vld [vmem:[#allocation7 + $0x38] sm:$0xff]
        %v1715 = vld [vmem:[#allocation7 + $0x40] sm:$0xff]
        %v1716 = vld [vmem:[#allocation7 + $0x48] sm:$0xff]
        %v1717 = vld [vmem:[#allocation7 + $0x50] sm:$0xff]
        %v1718 = vld [vmem:[#allocation7 + $0x58] sm:$0xff]
        %v1719 = vld [vmem:[#allocation7 + $0x60] sm:$0xff]
        %v1720 = vld [vmem:[#allocation7 + $0x68] sm:$0xff]
        %v1721 = vld [vmem:[#allocation7 + $0x70] sm:$0xff]
        %v1722 = vld [vmem:[#allocation7 + $0x78] sm:$0xff]
        %1723 = vmatprep.subr.mxu0 0.0
        %1724 = vmatpush1.msra.mxu0 %v1722
        %1725 = vmatprep.subr.mxu0 0.0
        %1726 = vmatpush1.msra.mxu0 %v1721
        %1727 = vmatprep.subr.mxu0 0.0
        %1728 = vmatpush1.msra.mxu0 %v1720
        %1729 = vmatprep.subr.mxu0 0.0
        %1730 = vmatpush1.msra.mxu0 %v1719
        %1731 = vmatprep.subr.mxu0 0.0
        %1732 = vmatpush1.msra.mxu0 %v1718
        %1733 = vmatprep.subr.mxu0 0.0
        %1734 = vmatpush1.msra.mxu0 %v1717
        %1735 = vmatprep.subr.mxu0 0.0
        %1736 = vmatpush1.msra.mxu0 %v1716
        %1737 = vmatprep.subr.mxu0 0.0
        %1738 = vmatpush1.msra.mxu0 %v1715
        %1739 = vmatprep.subr.mxu0 0.0
        %1740 = vmatpush1.msra.mxu0 %v1714
        %1741 = vmatprep.subr.mxu0 0.0
        %1742 = vmatpush1.msra.mxu0 %v1713
        %1743 = vmatprep.subr.mxu0 0.0
        %1744 = vmatpush1.msra.mxu0 %v1712
        %1745 = vmatprep.subr.mxu0 0.0
        %1746 = vmatpush1.msra.mxu0 %v1711
        %1747 = vmatprep.subr.mxu0 0.0
        %1748 = vmatpush1.msra.mxu0 %v1710
        %1749 = vmatprep.subr.mxu0 0.0
        %1750 = vmatpush1.msra.mxu0 %v1709
        %1751 = vmatprep.subr.mxu0 0.0
        %1752 = vmatpush1.msra.mxu0 %v1708
        %1753 = vmatprep.subr.mxu0 0.0
        %1754 = vmatpush1.msra.mxu0 %v1707
        %1755 = vmatprep.subr.mxu0 0.0
        %1756 = vmatpush2.msra.mxu0 0.0
        %1757 = vmatprep.subr.mxu0 0.0
        %1758 = vmatpush2.msra.mxu0 0.0
        %1759 = vmatprep.subr.mxu0 0.0
        %1760 = vmatpush2.msra.mxu0 0.0
        %1761 = vmatprep.subr.mxu0 0.0
        %1762 = vmatpush2.msra.mxu0 0.0
        %1763 = vmatprep.subr.mxu0 0.0
        %1764 = vmatpush2.msra.mxu0 0.0
        %1765 = vmatprep.subr.mxu0 0.0
        %1766 = vmatpush2.msra.mxu0 0.0
        %1767 = vmatprep.subr.mxu0 0.0
        %1768 = vmatpush2.msra.mxu0 0.0
        %1769 = vmatprep.subr.mxu0 0.0
        %1770 = vmatpush2.msra.mxu0 0.0
        %1771 = vmatprep.subr.mxu0 0.0
        %1772 = vmatpush2.msra.mxu0 0.0
        %1773 = vmatprep.subr.mxu0 0.0
        %1774 = vmatpush2.msra.mxu0 0.0
        %1775 = vmatprep.subr.mxu0 0.0
        %1776 = vmatpush2.msra.mxu0 0.0
        %1777 = vmatprep.subr.mxu0 0.0
        %1778 = vmatpush2.msra.mxu0 0.0
        %1779 = vmatprep.subr.mxu0 0.0
        %1780 = vmatpush2.msra.mxu0 0.0
        %1781 = vmatprep.subr.mxu0 0.0
        %1782 = vmatpush2.msra.mxu0 0.0
        %1783 = vmatprep.subr.mxu0 0.0
        %1784 = vmatpush2.msra.mxu0 0.0
        %1785 = vmatprep.subr.mxu0 0.0
        %1786 = vmatpush2.msra.mxu0 0.0
        %1787 = vmatprep.mubr.f32.mxu0 0.0
        %1788 = vmatmul.mubr.f32.gmra.mxu0 %v1706
        %v1789 = vpop.f32.mrf.mxu0
        %v1790 = vadd.f32 0.0, %v1789
        %v1791 = vpop.f32.mrf.mxu0
        %1792 = vdwg.mxu0
        %v1793 = vmax.f32 %v1790, -3.0
        %v1794 = vmin.f32 %v1793, 3.0
        %s1795 = sadd.s32 %s440, 3
        %v1796 = vstv %s1795
        %vm1797 = vcmp.lt.s32.totalorder %v1796, %v439
        %v1798 = vsel %vm1797, 1, 0
        %1799 = vset.pattern.permute.xlu0 0
        %1800 = vperm.xlu0 %1799, %v1798
        %v1801 = vpop.permute.xlu0 %1800
        %vm1802 = vcmp.eq.s32.totalorder %v1801, 1
        %v1803 = vsel %vm1802, %v1704, %v1461
        %v1804 = vsel %vm1802, %v1794, %v1462
        %v1805 = vsel %vm1802, %v1794, 0.0
        %s1806 = scalar_lea.vmem %s412, 24 [#allocation8]
        %1807 = vst [vmem:[%s1806] sm:$0xff] %v1805
        %1808 = vst [vmem:[#allocation9] sm:$0xff] %v1804
        %1809 = vst [vmem:[#allocation11] sm:$0xff] %v1803
        %s1810 = sand.u32 %s198, 1
        %s1811 = scalar_lea.sflag [#allocation4], %s1810
        %s1812 = sand.u32 %s198, 1
        %s1813 = smul.addr %s1812, 32
        %s1814 = scalar_lea.vmem [#allocation8], %s1813
        // Predicated region
        $region61: #{tpu_custom_call.1} parent=43 // pred_check
          %p1815 = pneg %p208
        $region62: #{tpu_custom_call.1} parent=43 // pred_check_branch
          %1817 = sbr.rel (%p1815) target = $region64
        $region63: #{tpu_custom_call.1} parent=43 // pred_region
          %s1818 = smul.u32 4, %s33
          %s1820 = ssub.s32 512, 512
          %1821 = vsyncadd %s1811, %s1820
          %s1822 = sadd.s32 %s32, %s1818
          %s1823 = smul.addr %s1822, 128
          %s1824 = scalar_lea.hbm %s6, %s1823
          %s1825 = sshll.u32 %s1814, 4
          %s1826 = int_to_ptr.vmem [resolvable:$true] %s1825
          %1831 = dma.vmem_to_hbm [thread:$0]  %s1826, 512, %s1824, %s1811, 128, 128, 8
        $region64: #{tpu_custom_call.1} parent=43 // pred_fallthru
          _
        // Predicated region
        $region65: #{tpu_custom_call.1} parent=43 // pred_check
          %p1832 = pneg %p234
        $region66: #{tpu_custom_call.1} parent=43 // pred_check_branch
          %1834 = sbr.rel (%p1832) target = $region68
        $region67: #{tpu_custom_call.1} parent=43 // pred_region
          %s1836 = ssub.s32 128, 128
          %1837 = vsyncadd [#allocation10], %s1836
          %s1838 = smul.addr %s32, 128
          %s1839 = scalar_lea.hbm %s7, %s1838
          %s1841 = sshll.u32 [#allocation9], 4
          %s1842 = int_to_ptr.vmem [resolvable:$true] %s1841
          %1844 = dma.vmem_to_hbm [thread:$0]  %s1842, 128, %s1839, [#allocation10]
        $region68: #{tpu_custom_call.1} parent=43 // pred_fallthru
          _
        // Predicated region
        $region69: #{tpu_custom_call.1} parent=43 // pred_check
          %p1845 = pneg %p260
        $region70: #{tpu_custom_call.1} parent=43 // pred_check_branch
          %1847 = sbr.rel (%p1845) target = $region72
        $region71: #{tpu_custom_call.1} parent=43 // pred_region
          %s1849 = ssub.s32 128, 128
          %1850 = vsyncadd [#allocation10], %s1849
          %s1851 = smul.addr %s32, 128
          %s1852 = scalar_lea.hbm %s8, %s1851
          %s1854 = sshll.u32 [#allocation11], 4
          %s1855 = int_to_ptr.vmem [resolvable:$true] %s1854
          %1857 = dma.vmem_to_hbm [thread:$0]  %s1855, 128, %s1852, [#allocation10]
        $region72: #{tpu_custom_call.1} parent=43 // pred_fallthru
          _
        // Predicated region
        $region73: #{tpu_custom_call.1} parent=43 // pred_check
          %p1858 = pneg %p234
        $region74: #{tpu_custom_call.1} parent=43 // pred_check_branch
          %1860 = sbr.rel (%p1858) target = $region76
        $region75: #{tpu_custom_call.1} parent=43 // pred_region
          %1861 = dma.done [#allocation10], 128
        $region76: #{tpu_custom_call.1} parent=43 // pred_fallthru
          _
        // Predicated region
        $region77: #{tpu_custom_call.1} parent=43 // pred_check
          %p1862 = pneg %p260
        $region78: #{tpu_custom_call.1} parent=43 // pred_check_branch
          %1864 = sbr.rel (%p1862) target = $region80
        $region79: #{tpu_custom_call.1} parent=43 // pred_region
          %1865 = dma.done [#allocation10], 128
        $region80: #{tpu_custom_call.1} parent=43 // pred_fallthru
          _
      $region44: #{tpu_custom_call.1} parent=5 // pred_fallthru
        _
      %p1866 = scmp.le.s32.totalorder 2, %s23
      // Predicated region
      $region81: #{tpu_custom_call.1} parent=5 // pred_check
        %p1867 = pneg %p1866
      $region82: #{tpu_custom_call.1} parent=5 // pred_check_branch
        %1869 = sbr.rel (%p1867) target = $region84
      $region83: #{tpu_custom_call.1} parent=5 // pred_region
        %s1870 = ssub.s32 %s23, 2
        // Predicated region
        $region85: #{tpu_custom_call.1} parent=83 // pred_check
          %p1871 = pneg %p214
        $region86: #{tpu_custom_call.1} parent=83 // pred_check_branch
          %1873 = sbr.rel (%p1871) target = $region88
        $region87: #{tpu_custom_call.1} parent=83 // pred_region
          %s1874 = sand.u32 %s199, 1
          %s1875 = scalar_lea.sflag [#allocation4], %s1874
          %s1876 = sand.u32 %s199, 1
          %s1877 = smul.addr %s1876, 32
          %s1878 = scalar_lea.vmem [#allocation8], %s1877
          %1879 = dma.done %s1875, 512
        $region88: #{tpu_custom_call.1} parent=83 // pred_fallthru
          _
      $region84: #{tpu_custom_call.1} parent=5 // pred_fallthru
        _
    $region6: #{tpu_custom_call.1} parent=1 // loop_footer
      %s27 = sadd.s32 1, %s23
    $region7: #{tpu_custom_call.1} parent=1 // loop_footer_branch
      %22 = sbr.rel target = $region3
    $region8: #{tpu_custom_call.1} parent=1 // loop_exit
      _
    %1880 = vsyncpa [#allocation3], 1
    %s1881 = scalar_lea.sflag [#allocation3], 1
    %1882 = vsyncpa %s1881, 1
    %1883 = vsyncpa [#allocation6], 1
    %1884 = vsyncpa [#allocation4], 1
    %s1885 = scalar_lea.sflag [#allocation4], 1
    %1886 = vsyncpa %s1885, 1
    %1887 = vsyncpa [#allocation10], 1

</llo_original>
